<compile_context>
chip_gen: v7x
topology: tpu7x:2x2x1
jax: 0.10.0
libtpu: 0.0.40
codegen_flags: <defaults>
</compile_context>

<pallas_src>
import functools

import jax
import jax.numpy as jnp
from jax.experimental import pallas as pl
from jax.experimental.pallas import tpu as pltpu

EPS = 1e-5
LANE = 128          # lane width (last dim)
BF16_SUBLANE = 16   # bf16 sublane packing (row-tile granularity)


def _silu(x):
    # Numerically stable SiLU in f32 with an EXACT reciprocal (no EUP approx):
    # the approximate reciprocal was the source of the previous mismatch.
    e = jnp.exp(-jnp.abs(x))
    inv = 1.0 / (1.0 + e)
    return x * jnp.where(x >= 0, inv, e * inv)


def _bn_scale_shift(s1, s2, count, gamma, beta):
    # Training-mode BatchNorm1d (biased variance) folded into y*scale + shift.
    # Single-pass variance E[y^2]-mean^2, clamped >= 0 (values here are O(1)).
    mean = s1 / count
    var = jnp.maximum(s2 / count - mean * mean, 0.0)
    scale = gamma * jax.lax.rsqrt(var + EPS)
    shift = beta - mean * scale
    return scale, shift


def _round_up(v, m):
    return (v + m - 1) // m * m


# ----------------------------- Pallas kernels --------------------------------

def _stage1_kernel(x_ref, wsk_ref, bsk_ref, w0_ref, b0_ref,
                   lsk_ref, a0_ref, st_ref):
    """Skip linear + Dense0(SiLU) on one row tile; emit per-tile BN partial sums."""
    x = x_ref[...]                                            # (TM, f_in) bf16
    lsk = jnp.dot(x, wsk_ref[...],
                  preferred_element_type=jnp.float32) + bsk_ref[...]
    a0 = _silu(jnp.dot(x, w0_ref[...],
                       preferred_element_type=jnp.float32) + b0_ref[...])
    lsk_ref[...] = lsk
    a0_ref[...] = a0
    z = jnp.zeros_like(bsk_ref[...])
    st_ref[...] = jnp.concatenate(
        [jnp.sum(lsk, axis=0, keepdims=True),
         jnp.sum(lsk * lsk, axis=0, keepdims=True),
         jnp.sum(a0, axis=0, keepdims=True),
         jnp.sum(a0 * a0, axis=0, keepdims=True),
         z, z, z, z], axis=0)


def _stage2_kernel(lsk_ref, a0_ref, scale_sk_ref, shift_sk_ref,
                   scale0_ref, shift0_ref, w1_ref, b1_ref,
                   a1_ref, st_ref):
    """Apply BN_skip/BN0, Dense1(SiLU) on one row tile; emit BN1 partial sums."""
    ident = lsk_ref[...] * scale_sk_ref[...] + shift_sk_ref[...]
    h = a0_ref[...] * scale0_ref[...] + shift0_ref[...] + ident
    a1 = _silu(jnp.dot(h.astype(jnp.bfloat16), w1_ref[...],
                       preferred_element_type=jnp.float32) + b1_ref[...])
    a1_ref[...] = a1
    z = jnp.zeros_like(b1_ref[...])
    st_ref[...] = jnp.concatenate(
        [jnp.sum(a1, axis=0, keepdims=True),
         jnp.sum(a1 * a1, axis=0, keepdims=True),
         z, z, z, z, z, z], axis=0)


def _stage3_kernel(lsk_ref, a1_ref, scale_sk_ref, shift_sk_ref,
                   scale1_ref, shift1_ref, out_ref):
    """Apply BN1 and add the identity branch (recomputed from the skip linear)."""
    ident = lsk_ref[...] * scale_sk_ref[...] + shift_sk_ref[...]
    out_ref[...] = a1_ref[...] * scale1_ref[...] + shift1_ref[...] + ident


# ------------------------------- wrapper --------------------------------------

def prepare_params(params):
    """One-time (init-time) feature padding to the 128-lane width + bf16 weight cast.
    Keeps padding/convert HLOs off the per-call path (review item)."""
    f_out = params["w0"].shape[1]
    f_out_pad = _round_up(f_out, LANE)

    def pad_w(w, pad_k=False):
        k, n = w.shape
        kp = _round_up(k, LANE) if pad_k else k
        return jnp.pad(w, ((0, kp - k), (0, f_out_pad - n))).astype(jnp.bfloat16)

    def pad_v(v):
        return jnp.pad(v, ((0, 0), (0, f_out_pad - v.shape[1]))).astype(jnp.float32)

    return {
        "skip_w": pad_w(params["skip_w"]), "skip_b": pad_v(params["skip_b"]),
        "skip_g": pad_v(params["skip_g"]), "skip_be": pad_v(params["skip_be"]),
        "w0": pad_w(params["w0"]), "b0": pad_v(params["b0"]),
        "g0": pad_v(params["g0"]), "be0": pad_v(params["be0"]),
        "w1": pad_w(params["w1"], pad_k=True), "b1": pad_v(params["b1"]),
        "g1": pad_v(params["g1"]), "be1": pad_v(params["be1"]),
    }


@functools.partial(jax.jit, static_argnames=("f_out", "block_rows"))
def residual_block(x, pp, f_out, block_rows=256):
    """ResidualBlock forward. x: (n, f_in) f32; pp: prepare_params() output."""
    n, f_in = x.shape
    assert pp["w0"].shape[0] == f_in
    assert block_rows % BF16_SUBLANE == 0
    f_out_pad = pp["w0"].shape[1]

    tm = block_rows if n >= block_rows else _round_up(n, BF16_SUBLANE)
    n_pad = _round_up(n, tm)
    num_tiles = n_pad // tm
    n_extra = float(n_pad - n)      # zero-padded rows (constant BN-sum contribution)
    count = float(n)

    row_blk = lambda i: (i, 0)
    const_blk = lambda i: (0, 0)
    cparams = pltpu.CompilerParams(dimension_semantics=("parallel",))

    row_spec_x = pl.BlockSpec((tm, f_in), row_blk)
    row_spec = pl.BlockSpec((tm, f_out_pad), row_blk)
    vec_spec = pl.BlockSpec((1, f_out_pad), const_blk)
    w_in_spec = pl.BlockSpec((f_in, f_out_pad), const_blk)
    w_sq_spec = pl.BlockSpec((f_out_pad, f_out_pad), const_blk)
    stat_spec = pl.BlockSpec((8, f_out_pad), row_blk)
    act_shape = jax.ShapeDtypeStruct((n_pad, f_out_pad), jnp.float32)
    stat_shape = jax.ShapeDtypeStruct((8 * num_tiles, f_out_pad), jnp.float32)

    # Row-pad x with zeros and cast to bf16 (fuses to a single padded copy).
    x_p = jnp.pad(x, ((0, n_pad - n), (0, 0))).astype(jnp.bfloat16)

    # ---- pass 1: skip linear + Dense0(SiLU) + per-tile BN partial sums --------
    l_sk, a0, st1 = pl.pallas_call(
        _stage1_kernel,
        grid=(num_tiles,),
        in_specs=[row_spec_x, w_in_spec, vec_spec, w_in_spec, vec_spec],
        out_specs=[row_spec, row_spec, stat_spec],
        out_shape=[act_shape, act_shape, stat_shape],
        compiler_params=cparams,
    )(x_p, pp["skip_w"], pp["skip_b"], pp["w0"], pp["b0"])

    st1 = st1.reshape(num_tiles, 8, f_out_pad).sum(axis=0)
    c_sk = pp["skip_b"]                 # skip-linear value on zero-padded rows
    c_a0 = _silu(pp["b0"])              # Dense0 value on zero-padded rows
    scale_sk, shift_sk = _bn_scale_shift(
        st1[0:1] - n_extra * c_sk, st1[1:2] - n_extra * c_sk * c_sk,
        count, pp["skip_g"], pp["skip_be"])
    scale_0, shift_0 = _bn_scale_shift(
        st1[2:3] - n_extra * c_a0, st1[3:4] - n_extra * c_a0 * c_a0,
        count, pp["g0"], pp["be0"])

    # ---- pass 2: apply BN_skip/BN0, Dense1(SiLU), per-tile BN1 partial sums ---
    a1, st2 = pl.pallas_call(
        _stage2_kernel,
        grid=(num_tiles,),
        in_specs=[row_spec, row_spec, vec_spec, vec_spec, vec_spec, vec_spec,
                  w_sq_spec, vec_spec],
        out_specs=[row_spec, stat_spec],
        out_shape=[act_shape, stat_shape],
        compiler_params=cparams,
    )(l_sk, a0, scale_sk, shift_sk, scale_0, shift_0, pp["w1"], pp["b1"])

    st2 = st2.reshape(num_tiles, 8, f_out_pad).sum(axis=0)
    id_c = c_sk * scale_sk + shift_sk                   # identity on padded rows
    h_c = c_a0 * scale_0 + shift_0 + id_c               # Dense1 input on padded rows
    c_a1 = _silu(jnp.dot(h_c.astype(jnp.bfloat16), pp["w1"],
                         preferred_element_type=jnp.float32) + pp["b1"])
    scale_1, shift_1 = _bn_scale_shift(
        st2[0:1] - n_extra * c_a1, st2[1:2] - n_extra * c_a1 * c_a1,
        count, pp["g1"], pp["be1"])

    # ---- pass 3: apply BN1 and add the identity branch ------------------------
    out = pl.pallas_call(
        _stage3_kernel,
        grid=(num_tiles,),
        in_specs=[row_spec, row_spec, vec_spec, vec_spec, vec_spec, vec_spec],
        out_specs=row_spec,
        out_shape=act_shape,
        compiler_params=cparams,
    )(l_sk, a1, scale_sk, shift_sk, scale_1, shift_1)

    return out[:n, :f_out]


# --------------------------- test harness -------------------------------------

def init_params(key, f_in, f_out):
    """Deterministic synthetic parameters (shapes match the PyTorch module).
    Linear weights stored pre-transposed as (F_in, F_out) so kernels run x @ W + b."""
    ks = jax.random.split(key, 12)
    u = lambda k, shape, s=0.2: jax.random.uniform(k, shape, jnp.float32, -s, s)
    return {
        # skip = Dense(in, out, activation=None) + BatchNorm1d(out)
        "skip_w": u(ks[0], (f_in, f_out)), "skip_b": u(ks[1], (1, f_out)),
        "skip_g": 1.0 + u(ks[2], (1, f_out), 0.1), "skip_be": u(ks[3], (1, f_out), 0.1),
        # layers[0] = Dense(in, out, SiLU), layers[1] = BatchNorm1d(out)
        "w0": u(ks[4], (f_in, f_out)), "b0": u(ks[5], (1, f_out)),
        "g0": 1.0 + u(ks[6], (1, f_out), 0.1), "be0": u(ks[7], (1, f_out), 0.1),
        # layers[2] = Dense(out, out, SiLU), layers[3] = BatchNorm1d(out)
        "w1": u(ks[8], (f_out, f_out)), "b1": u(ks[9], (1, f_out)),
        "g1": 1.0 + u(ks[10], (1, f_out), 0.1), "be1": u(ks[11], (1, f_out), 0.1),
    }


def _reference(x, p, mm_dtype=jnp.float32):
    """Plain-JAX reference with the PyTorch module semantics. mm_dtype=bfloat16
    mirrors the kernel's MXU numerics (bf16 operands, f32 accumulation)."""
    def mm(a, w):
        return jnp.dot(a.astype(mm_dtype), w.astype(mm_dtype),
                       preferred_element_type=jnp.float32)

    def bn(y, g, b):
        mean = jnp.mean(y, axis=0, keepdims=True)
        var = jnp.mean((y - mean) ** 2, axis=0, keepdims=True)
        return (y - mean) * jax.lax.rsqrt(var + EPS) * g + b

    identity = bn(mm(x, p["skip_w"]) + p["skip_b"], p["skip_g"], p["skip_be"])
    out = _silu(mm(x, p["w0"]) + p["b0"])
    out = bn(out, p["g0"], p["be0"]) + identity
    out = _silu(mm(out, p["w1"]) + p["b1"])
    out = bn(out, p["g1"], p["be1"]) + identity
    return out


if __name__ == "__main__":
    # Small shapes: 200 rows with block_rows=128 -> 2 row tiles (exercises the grid,
    # the cross-tile stat reduction, and the padded-row correction); F_OUT=96 -> 128
    # exercises feature padding.
    N, F_IN, F_OUT = 200, 64, 96

    key = jax.random.PRNGKey(0)
    k_x, k_p = jax.random.split(key)
    x = jax.random.normal(k_x, (N, F_IN), dtype=jnp.float32)
    params = init_params(k_p, F_IN, F_OUT)
    pp = prepare_params(params)          # one-time padding / bf16 cast (hoisted)

    out = jax.block_until_ready(residual_block(x, pp, f_out=F_OUT, block_rows=128))
    assert out.shape == (N, F_OUT)
    assert bool(jnp.all(jnp.isfinite(out)))

    # Check vs a reference mirroring the kernel's bf16 matmul numerics.
    ref_bf16 = _reference(x, params, mm_dtype=jnp.bfloat16)
    max_err = float(jnp.max(jnp.abs(out - ref_bf16)))
    assert bool(jnp.allclose(out, ref_bf16, atol=2e-2, rtol=2e-2)), \
        f"mismatch vs bf16-matmul reference, max|err|={max_err}"

    # Loose check vs exact f32 module semantics (bf16 MXU rounding dominates).
    ref_f32 = _reference(x, params, mm_dtype=jnp.float32)
    assert bool(jnp.allclose(out, ref_f32, atol=1e-1, rtol=1e-1)), \
        "mismatch vs f32 reference"

    print("KERNEL_OK")
</pallas_src>

<mosaic_0001>
module attributes {stable_mosaic.version = 11 : i64} {
  func.func @_stage1_kernel(%arg0: i32, %arg1: memref<128x64xbf16, #tpu.memory_space<vmem>>, %arg2: memref<64x128xbf16, #tpu.memory_space<vmem>>, %arg3: memref<1x128xf32, #tpu.memory_space<vmem>>, %arg4: memref<64x128xbf16, #tpu.memory_space<vmem>>, %arg5: memref<1x128xf32, #tpu.memory_space<vmem>>, %arg6: memref<128x128xf32, #tpu.memory_space<vmem>>, %arg7: memref<128x128xf32, #tpu.memory_space<vmem>>, %arg8: memref<8x128xf32, #tpu.memory_space<vmem>>) attributes {dimension_semantics = [#tpu.dimension_semantics<parallel>], iteration_bounds = array<i64: 2>, scalar_prefetch = 0 : i64, scratch_operands = 0 : i64, tpu.core_type = #tpu.core_type<tc>, window_params = [{transform_indices = @transform_0, window_bounds = array<i64: 128, 64>}, {pipeline_mode = #tpu.pipeline_mode<synchronous>, transform_indices = @transform_1, window_bounds = array<i64: 64, 128>}, {pipeline_mode = #tpu.pipeline_mode<synchronous>, transform_indices = @transform_2, window_bounds = array<i64: 1, 128>}, {pipeline_mode = #tpu.pipeline_mode<synchronous>, transform_indices = @transform_3, window_bounds = array<i64: 64, 128>}, {pipeline_mode = #tpu.pipeline_mode<synchronous>, transform_indices = @transform_4, window_bounds = array<i64: 1, 128>}, {transform_indices = @transform_5, window_bounds = array<i64: 128, 128>}, {transform_indices = @transform_6, window_bounds = array<i64: 128, 128>}, {transform_indices = @transform_7, window_bounds = array<i64: 8, 128>}]} {
    %c0 = arith.constant 0 : index
    %c0_0 = arith.constant 0 : index
    %0 = vector.load %arg1[%c0, %c0_0] : memref<128x64xbf16, #tpu.memory_space<vmem>>, vector<128x64xbf16>
    %c0_1 = arith.constant 0 : index
    %c0_2 = arith.constant 0 : index
    %1 = vector.load %arg2[%c0_1, %c0_2] : memref<64x128xbf16, #tpu.memory_space<vmem>>, vector<64x128xbf16>
    %cst = arith.constant dense<0.000000e+00> : vector<128x128xf32>
    %2 = tpu.matmul %0, %1, %cst {dimension_numbers = #tpu.dot_dimension_numbers<[1], [0], [0], [1], [0, 0, 1, 1], [], []>} : vector<128x64xbf16>, vector<64x128xbf16>, vector<128x128xf32> -> vector<128x128xf32>
    %c0_3 = arith.constant 0 : index
    %c0_4 = arith.constant 0 : index
    %3 = vector.load %arg3[%c0_3, %c0_4] : memref<1x128xf32, #tpu.memory_space<vmem>>, vector<1x128xf32>
    %4 = vector.broadcast %3 : vector<1x128xf32> to vector<128x128xf32>
    %5 = arith.addf %2, %4 : vector<128x128xf32>
    %c0_5 = arith.constant 0 : index
    %c0_6 = arith.constant 0 : index
    %6 = vector.load %arg4[%c0_5, %c0_6] : memref<64x128xbf16, #tpu.memory_space<vmem>>, vector<64x128xbf16>
    %cst_7 = arith.constant dense<0.000000e+00> : vector<128x128xf32>
    %7 = tpu.matmul %0, %6, %cst_7 {dimension_numbers = #tpu.dot_dimension_numbers<[1], [0], [0], [1], [0, 0, 1, 1], [], []>} : vector<128x64xbf16>, vector<64x128xbf16>, vector<128x128xf32> -> vector<128x128xf32>
    %c0_8 = arith.constant 0 : index
    %c0_9 = arith.constant 0 : index
    %8 = vector.load %arg5[%c0_8, %c0_9] : memref<1x128xf32, #tpu.memory_space<vmem>>, vector<1x128xf32>
    %9 = vector.broadcast %8 : vector<1x128xf32> to vector<128x128xf32>
    %10 = arith.addf %7, %9 : vector<128x128xf32>
    %11 = math.absf %10 : vector<128x128xf32>
    %cst_10 = arith.constant 0.000000e+00 : f32
    %12 = vector.broadcast %cst_10 : f32 to vector<128x128xf32>
    %13 = arith.subf %12, %11 : vector<128x128xf32>
    %14 = math.exp %13 : vector<128x128xf32>
    %cst_11 = arith.constant 1.000000e+00 : f32
    %15 = vector.broadcast %cst_11 : f32 to vector<128x128xf32>
    %16 = arith.addf %15, %14 : vector<128x128xf32>
    %cst_12 = arith.constant 1.000000e+00 : f32
    %17 = vector.broadcast %cst_12 : f32 to vector<128x128xf32>
    %18 = arith.divf %17, %16 : vector<128x128xf32>
    %cst_13 = arith.constant 0.000000e+00 : f32
    %19 = vector.broadcast %cst_13 : f32 to vector<128x128xf32>
    %20 = arith.cmpf oge, %10, %19 : vector<128x128xf32>
    %21 = arith.mulf %14, %18 : vector<128x128xf32>
    %22 = arith.select %20, %18, %21 : vector<128x128xi1>, vector<128x128xf32>
    %23 = arith.mulf %10, %22 : vector<128x128xf32>
    %c0_14 = arith.constant 0 : index
    %c0_15 = arith.constant 0 : index
    %24 = vector.load %arg6[%c0_14, %c0_15] : memref<128x128xf32, #tpu.memory_space<vmem>>, vector<128x128xf32>
    tpu.vector_store %arg6[%c0_14, %c0_15], %5 {strides = array<i32>} : memref<128x128xf32, #tpu.memory_space<vmem>>, vector<128x128xf32>,
    %c0_16 = arith.constant 0 : index
    %c0_17 = arith.constant 0 : index
    %25 = vector.load %arg7[%c0_16, %c0_17] : memref<128x128xf32, #tpu.memory_space<vmem>>, vector<128x128xf32>
    tpu.vector_store %arg7[%c0_16, %c0_17], %23 {strides = array<i32>} : memref<128x128xf32, #tpu.memory_space<vmem>>, vector<128x128xf32>,
    %cst_18 = arith.constant 0.000000e+00 : f32
    %26 = vector.broadcast %cst_18 : f32 to vector<1x128xf32>
    %cst_19 = arith.constant dense<0.000000e+00> : vector<128xf32>
    %27 = vector.multi_reduction <add>, %5, %cst_19 [0] : vector<128x128xf32> to vector<128xf32>
    %28 = vector.shape_cast %27 : vector<128xf32> to vector<1x128xf32>
    %29 = arith.mulf %5, %5 : vector<128x128xf32>
    %cst_20 = arith.constant dense<0.000000e+00> : vector<128xf32>
    %30 = vector.multi_reduction <add>, %29, %cst_20 [0] : vector<128x128xf32> to vector<128xf32>
    %31 = vector.shape_cast %30 : vector<128xf32> to vector<1x128xf32>
    %cst_21 = arith.constant dense<0.000000e+00> : vector<128xf32>
    %32 = vector.multi_reduction <add>, %23, %cst_21 [0] : vector<128x128xf32> to vector<128xf32>
    %33 = vector.shape_cast %32 : vector<128xf32> to vector<1x128xf32>
    %34 = arith.mulf %23, %23 : vector<128x128xf32>
    %cst_22 = arith.constant dense<0.000000e+00> : vector<128xf32>
    %35 = vector.multi_reduction <add>, %34, %cst_22 [0] : vector<128x128xf32> to vector<128xf32>
    %36 = vector.shape_cast %35 : vector<128xf32> to vector<1x128xf32>
    %37 = tpu.concatenate %28, %31, %33, %36, %26, %26, %26, %26 in 0 : vector<1x128xf32>, vector<1x128xf32>, vector<1x128xf32>, vector<1x128xf32>, vector<1x128xf32>, vector<1x128xf32>, vector<1x128xf32>, vector<1x128xf32> -> vector<8x128xf32>
    %c0_23 = arith.constant 0 : index
    %c0_24 = arith.constant 0 : index
    %38 = vector.load %arg8[%c0_23, %c0_24] : memref<8x128xf32, #tpu.memory_space<vmem>>, vector<8x128xf32>
    tpu.vector_store %arg8[%c0_23, %c0_24], %37 {strides = array<i32>} : memref<8x128xf32, #tpu.memory_space<vmem>>, vector<8x128xf32>,
    return
  }
  func.func @transform_0(%arg0: i32) -> (i32, i32) {
    %c0_i32 = arith.constant 0 : i32
    %c0_i32_0 = arith.constant 0 : i32
    return %arg0, %c0_i32 : i32, i32
  }
  func.func @transform_1(%arg0: i32) -> (i32, i32) {
    %c0_i32 = arith.constant 0 : i32
    %c0_i32_0 = arith.constant 0 : i32
    %c0_i32_1 = arith.constant 0 : i32
    return %c0_i32, %c0_i32_0 : i32, i32
  }
  func.func @transform_2(%arg0: i32) -> (i32, i32) {
    %c0_i32 = arith.constant 0 : i32
    %c0_i32_0 = arith.constant 0 : i32
    %c0_i32_1 = arith.constant 0 : i32
    return %c0_i32, %c0_i32_0 : i32, i32
  }
  func.func @transform_3(%arg0: i32) -> (i32, i32) {
    %c0_i32 = arith.constant 0 : i32
    %c0_i32_0 = arith.constant 0 : i32
    %c0_i32_1 = arith.constant 0 : i32
    return %c0_i32, %c0_i32_0 : i32, i32
  }
  func.func @transform_4(%arg0: i32) -> (i32, i32) {
    %c0_i32 = arith.constant 0 : i32
    %c0_i32_0 = arith.constant 0 : i32
    %c0_i32_1 = arith.constant 0 : i32
    return %c0_i32, %c0_i32_0 : i32, i32
  }
  func.func @transform_5(%arg0: i32) -> (i32, i32) {
    %c0_i32 = arith.constant 0 : i32
    %c0_i32_0 = arith.constant 0 : i32
    return %arg0, %c0_i32 : i32, i32
  }
  func.func @transform_6(%arg0: i32) -> (i32, i32) {
    %c0_i32 = arith.constant 0 : i32
    %c0_i32_0 = arith.constant 0 : i32
    return %arg0, %c0_i32 : i32, i32
  }
  func.func @transform_7(%arg0: i32) -> (i32, i32) {
    %c0_i32 = arith.constant 0 : i32
    %c0_i32_0 = arith.constant 0 : i32
    return %arg0, %c0_i32 : i32, i32
  }
}

module attributes {stable_mosaic.version = 11 : i64} {
  func.func @_stage2_kernel(%arg0: i32, %arg1: memref<128x128xf32, #tpu.memory_space<vmem>>, %arg2: memref<128x128xf32, #tpu.memory_space<vmem>>, %arg3: memref<1x128xf32, #tpu.memory_space<vmem>>, %arg4: memref<1x128xf32, #tpu.memory_space<vmem>>, %arg5: memref<1x128xf32, #tpu.memory_space<vmem>>, %arg6: memref<1x128xf32, #tpu.memory_space<vmem>>, %arg7: memref<128x128xbf16, #tpu.memory_space<vmem>>, %arg8: memref<1x128xf32, #tpu.memory_space<vmem>>, %arg9: memref<128x128xf32, #tpu.memory_space<vmem>>, %arg10: memref<8x128xf32, #tpu.memory_space<vmem>>) attributes {dimension_semantics = [#tpu.dimension_semantics<parallel>], iteration_bounds = array<i64: 2>, scalar_prefetch = 0 : i64, scratch_operands = 0 : i64, tpu.core_type = #tpu.core_type<tc>, window_params = [{transform_indices = @transform_0, window_bounds = array<i64: 128, 128>}, {transform_indices = @transform_1, window_bounds = array<i64: 128, 128>}, {pipeline_mode = #tpu.pipeline_mode<synchronous>, transform_indices = @transform_2, window_bounds = array<i64: 1, 128>}, {pipeline_mode = #tpu.pipeline_mode<synchronous>, transform_indices = @transform_3, window_bounds = array<i64: 1, 128>}, {pipeline_mode = #tpu.pipeline_mode<synchronous>, transform_indices = @transform_4, window_bounds = array<i64: 1, 128>}, {pipeline_mode = #tpu.pipeline_mode<synchronous>, transform_indices = @transform_5, window_bounds = array<i64: 1, 128>}, {pipeline_mode = #tpu.pipeline_mode<synchronous>, transform_indices = @transform_6, window_bounds = array<i64: 128, 128>}, {pipeline_mode = #tpu.pipeline_mode<synchronous>, transform_indices = @transform_7, window_bounds = array<i64: 1, 128>}, {transform_indices = @transform_8, window_bounds = array<i64: 128, 128>}, {transform_indices = @transform_9, window_bounds = array<i64: 8, 128>}]} {
    %c0 = arith.constant 0 : index
    %c0_0 = arith.constant 0 : index
    %0 = vector.load %arg1[%c0, %c0_0] : memref<128x128xf32, #tpu.memory_space<vmem>>, vector<128x128xf32>
    %c0_1 = arith.constant 0 : index
    %c0_2 = arith.constant 0 : index
    %1 = vector.load %arg3[%c0_1, %c0_2] : memref<1x128xf32, #tpu.memory_space<vmem>>, vector<1x128xf32>
    %2 = vector.broadcast %1 : vector<1x128xf32> to vector<128x128xf32>
    %3 = arith.mulf %0, %2 : vector<128x128xf32>
    %c0_3 = arith.constant 0 : index
    %c0_4 = arith.constant 0 : index
    %4 = vector.load %arg4[%c0_3, %c0_4] : memref<1x128xf32, #tpu.memory_space<vmem>>, vector<1x128xf32>
    %5 = vector.broadcast %4 : vector<1x128xf32> to vector<128x128xf32>
    %6 = arith.addf %3, %5 : vector<128x128xf32>
    %c0_5 = arith.constant 0 : index
    %c0_6 = arith.constant 0 : index
    %7 = vector.load %arg2[%c0_5, %c0_6] : memref<128x128xf32, #tpu.memory_space<vmem>>, vector<128x128xf32>
    %c0_7 = arith.constant 0 : index
    %c0_8 = arith.constant 0 : index
    %8 = vector.load %arg5[%c0_7, %c0_8] : memref<1x128xf32, #tpu.memory_space<vmem>>, vector<1x128xf32>
    %9 = vector.broadcast %8 : vector<1x128xf32> to vector<128x128xf32>
    %10 = arith.mulf %7, %9 : vector<128x128xf32>
    %c0_9 = arith.constant 0 : index
    %c0_10 = arith.constant 0 : index
    %11 = vector.load %arg6[%c0_9, %c0_10] : memref<1x128xf32, #tpu.memory_space<vmem>>, vector<1x128xf32>
    %12 = vector.broadcast %11 : vector<1x128xf32> to vector<128x128xf32>
    %13 = arith.addf %10, %12 : vector<128x128xf32>
    %14 = arith.addf %13, %6 : vector<128x128xf32>
    %15 = arith.truncf %14 : vector<128x128xf32> to vector<128x128xbf16>
    %c0_11 = arith.constant 0 : index
    %c0_12 = arith.constant 0 : index
    %16 = vector.load %arg7[%c0_11, %c0_12] : memref<128x128xbf16, #tpu.memory_space<vmem>>, vector<128x128xbf16>
    %cst = arith.constant dense<0.000000e+00> : vector<128x128xf32>
    %17 = tpu.matmul %15, %16, %cst {dimension_numbers = #tpu.dot_dimension_numbers<[1], [0], [0], [1], [0, 0, 1, 1], [], []>} : vector<128x128xbf16>, vector<128x128xbf16>, vector<128x128xf32> -> vector<128x128xf32>
    %c0_13 = arith.constant 0 : index
    %c0_14 = arith.constant 0 : index
    %18 = vector.load %arg8[%c0_13, %c0_14] : memref<1x128xf32, #tpu.memory_space<vmem>>, vector<1x128xf32>
    %19 = vector.broadcast %18 : vector<1x128xf32> to vector<128x128xf32>
    %20 = arith.addf %17, %19 : vector<128x128xf32>
    %21 = math.absf %20 : vector<128x128xf32>
    %cst_15 = arith.constant 0.000000e+00 : f32
    %22 = vector.broadcast %cst_15 : f32 to vector<128x128xf32>
    %23 = arith.subf %22, %21 : vector<128x128xf32>
    %24 = math.exp %23 : vector<128x128xf32>
    %cst_16 = arith.constant 1.000000e+00 : f32
    %25 = vector.broadcast %cst_16 : f32 to vector<128x128xf32>
    %26 = arith.addf %25, %24 : vector<128x128xf32>
    %cst_17 = arith.constant 1.000000e+00 : f32
    %27 = vector.broadcast %cst_17 : f32 to vector<128x128xf32>
    %28 = arith.divf %27, %26 : vector<128x128xf32>
    %cst_18 = arith.constant 0.000000e+00 : f32
    %29 = vector.broadcast %cst_18 : f32 to vector<128x128xf32>
    %30 = arith.cmpf oge, %20, %29 : vector<128x128xf32>
    %31 = arith.mulf %24, %28 : vector<128x128xf32>
    %32 = arith.select %30, %28, %31 : vector<128x128xi1>, vector<128x128xf32>
    %33 = arith.mulf %20, %32 : vector<128x128xf32>
    %c0_19 = arith.constant 0 : index
    %c0_20 = arith.constant 0 : index
    %34 = vector.load %arg9[%c0_19, %c0_20] : memref<128x128xf32, #tpu.memory_space<vmem>>, vector<128x128xf32>
    tpu.vector_store %arg9[%c0_19, %c0_20], %33 {strides = array<i32>} : memref<128x128xf32, #tpu.memory_space<vmem>>, vector<128x128xf32>,
    %cst_21 = arith.constant 0.000000e+00 : f32
    %35 = vector.broadcast %cst_21 : f32 to vector<1x128xf32>
    %cst_22 = arith.constant dense<0.000000e+00> : vector<128xf32>
    %36 = vector.multi_reduction <add>, %33, %cst_22 [0] : vector<128x128xf32> to vector<128xf32>
    %37 = vector.shape_cast %36 : vector<128xf32> to vector<1x128xf32>
    %38 = arith.mulf %33, %33 : vector<128x128xf32>
    %cst_23 = arith.constant dense<0.000000e+00> : vector<128xf32>
    %39 = vector.multi_reduction <add>, %38, %cst_23 [0] : vector<128x128xf32> to vector<128xf32>
    %40 = vector.shape_cast %39 : vector<128xf32> to vector<1x128xf32>
    %41 = tpu.concatenate %37, %40, %35, %35, %35, %35, %35, %35 in 0 : vector<1x128xf32>, vector<1x128xf32>, vector<1x128xf32>, vector<1x128xf32>, vector<1x128xf32>, vector<1x128xf32>, vector<1x128xf32>, vector<1x128xf32> -> vector<8x128xf32>
    %c0_24 = arith.constant 0 : index
    %c0_25 = arith.constant 0 : index
    %42 = vector.load %arg10[%c0_24, %c0_25] : memref<8x128xf32, #tpu.memory_space<vmem>>, vector<8x128xf32>
    tpu.vector_store %arg10[%c0_24, %c0_25], %41 {strides = array<i32>} : memref<8x128xf32, #tpu.memory_space<vmem>>, vector<8x128xf32>,
    return
  }
  func.func @transform_0(%arg0: i32) -> (i32, i32) {
    %c0_i32 = arith.constant 0 : i32
    %c0_i32_0 = arith.constant 0 : i32
    return %arg0, %c0_i32 : i32, i32
  }
  func.func @transform_1(%arg0: i32) -> (i32, i32) {
    %c0_i32 = arith.constant 0 : i32
    %c0_i32_0 = arith.constant 0 : i32
    return %arg0, %c0_i32 : i32, i32
  }
  func.func @transform_2(%arg0: i32) -> (i32, i32) {
    %c0_i32 = arith.constant 0 : i32
    %c0_i32_0 = arith.constant 0 : i32
    %c0_i32_1 = arith.constant 0 : i32
    return %c0_i32, %c0_i32_0 : i32, i32
  }
  func.func @transform_3(%arg0: i32) -> (i32, i32) {
    %c0_i32 = arith.constant 0 : i32
    %c0_i32_0 = arith.constant 0 : i32
    %c0_i32_1 = arith.constant 0 : i32
    return %c0_i32, %c0_i32_0 : i32, i32
  }
  func.func @transform_4(%arg0: i32) -> (i32, i32) {
    %c0_i32 = arith.constant 0 : i32
    %c0_i32_0 = arith.constant 0 : i32
    %c0_i32_1 = arith.constant 0 : i32
    return %c0_i32, %c0_i32_0 : i32, i32
  }
  func.func @transform_5(%arg0: i32) -> (i32, i32) {
    %c0_i32 = arith.constant 0 : i32
    %c0_i32_0 = arith.constant 0 : i32
    %c0_i32_1 = arith.constant 0 : i32
    return %c0_i32, %c0_i32_0 : i32, i32
  }
  func.func @transform_6(%arg0: i32) -> (i32, i32) {
    %c0_i32 = arith.constant 0 : i32
    %c0_i32_0 = arith.constant 0 : i32
    %c0_i32_1 = arith.constant 0 : i32
    return %c0_i32, %c0_i32_0 : i32, i32
  }
  func.func @transform_7(%arg0: i32) -> (i32, i32) {
    %c0_i32 = arith.constant 0 : i32
    %c0_i32_0 = arith.constant 0 : i32
    %c0_i32_1 = arith.constant 0 : i32
    return %c0_i32, %c0_i32_0 : i32, i32
  }
  func.func @transform_8(%arg0: i32) -> (i32, i32) {
    %c0_i32 = arith.constant 0 : i32
    %c0_i32_0 = arith.constant 0 : i32
    return %arg0, %c0_i32 : i32, i32
  }
  func.func @transform_9(%arg0: i32) -> (i32, i32) {
    %c0_i32 = arith.constant 0 : i32
    %c0_i32_0 = arith.constant 0 : i32
    return %arg0, %c0_i32 : i32, i32
  }
}

module attributes {stable_mosaic.version = 11 : i64} {
  func.func @_stage3_kernel(%arg0: i32, %arg1: memref<128x128xf32, #tpu.memory_space<vmem>>, %arg2: memref<128x128xf32, #tpu.memory_space<vmem>>, %arg3: memref<1x128xf32, #tpu.memory_space<vmem>>, %arg4: memref<1x128xf32, #tpu.memory_space<vmem>>, %arg5: memref<1x128xf32, #tpu.memory_space<vmem>>, %arg6: memref<1x128xf32, #tpu.memory_space<vmem>>, %arg7: memref<128x128xf32, #tpu.memory_space<vmem>>) attributes {dimension_semantics = [#tpu.dimension_semantics<parallel>], iteration_bounds = array<i64: 2>, scalar_prefetch = 0 : i64, scratch_operands = 0 : i64, tpu.core_type = #tpu.core_type<tc>, window_params = [{transform_indices = @transform_0, window_bounds = array<i64: 128, 128>}, {transform_indices = @transform_1, window_bounds = array<i64: 128, 128>}, {pipeline_mode = #tpu.pipeline_mode<synchronous>, transform_indices = @transform_2, window_bounds = array<i64: 1, 128>}, {pipeline_mode = #tpu.pipeline_mode<synchronous>, transform_indices = @transform_3, window_bounds = array<i64: 1, 128>}, {pipeline_mode = #tpu.pipeline_mode<synchronous>, transform_indices = @transform_4, window_bounds = array<i64: 1, 128>}, {pipeline_mode = #tpu.pipeline_mode<synchronous>, transform_indices = @transform_5, window_bounds = array<i64: 1, 128>}, {transform_indices = @transform_6, window_bounds = array<i64: 128, 128>}]} {
    %c0 = arith.constant 0 : index
    %c0_0 = arith.constant 0 : index
    %0 = vector.load %arg1[%c0, %c0_0] : memref<128x128xf32, #tpu.memory_space<vmem>>, vector<128x128xf32>
    %c0_1 = arith.constant 0 : index
    %c0_2 = arith.constant 0 : index
    %1 = vector.load %arg3[%c0_1, %c0_2] : memref<1x128xf32, #tpu.memory_space<vmem>>, vector<1x128xf32>
    %2 = vector.broadcast %1 : vector<1x128xf32> to vector<128x128xf32>
    %3 = arith.mulf %0, %2 : vector<128x128xf32>
    %c0_3 = arith.constant 0 : index
    %c0_4 = arith.constant 0 : index
    %4 = vector.load %arg4[%c0_3, %c0_4] : memref<1x128xf32, #tpu.memory_space<vmem>>, vector<1x128xf32>
    %5 = vector.broadcast %4 : vector<1x128xf32> to vector<128x128xf32>
    %6 = arith.addf %3, %5 : vector<128x128xf32>
    %c0_5 = arith.constant 0 : index
    %c0_6 = arith.constant 0 : index
    %7 = vector.load %arg2[%c0_5, %c0_6] : memref<128x128xf32, #tpu.memory_space<vmem>>, vector<128x128xf32>
    %c0_7 = arith.constant 0 : index
    %c0_8 = arith.constant 0 : index
    %8 = vector.load %arg5[%c0_7, %c0_8] : memref<1x128xf32, #tpu.memory_space<vmem>>, vector<1x128xf32>
    %9 = vector.broadcast %8 : vector<1x128xf32> to vector<128x128xf32>
    %10 = arith.mulf %7, %9 : vector<128x128xf32>
    %c0_9 = arith.constant 0 : index
    %c0_10 = arith.constant 0 : index
    %11 = vector.load %arg6[%c0_9, %c0_10] : memref<1x128xf32, #tpu.memory_space<vmem>>, vector<1x128xf32>
    %12 = vector.broadcast %11 : vector<1x128xf32> to vector<128x128xf32>
    %13 = arith.addf %10, %12 : vector<128x128xf32>
    %14 = arith.addf %13, %6 : vector<128x128xf32>
    %c0_11 = arith.constant 0 : index
    %c0_12 = arith.constant 0 : index
    %15 = vector.load %arg7[%c0_11, %c0_12] : memref<128x128xf32, #tpu.memory_space<vmem>>, vector<128x128xf32>
    tpu.vector_store %arg7[%c0_11, %c0_12], %14 {strides = array<i32>} : memref<128x128xf32, #tpu.memory_space<vmem>>, vector<128x128xf32>,
    return
  }
  func.func @transform_0(%arg0: i32) -> (i32, i32) {
    %c0_i32 = arith.constant 0 : i32
    %c0_i32_0 = arith.constant 0 : i32
    return %arg0, %c0_i32 : i32, i32
  }
  func.func @transform_1(%arg0: i32) -> (i32, i32) {
    %c0_i32 = arith.constant 0 : i32
    %c0_i32_0 = arith.constant 0 : i32
    return %arg0, %c0_i32 : i32, i32
  }
  func.func @transform_2(%arg0: i32) -> (i32, i32) {
    %c0_i32 = arith.constant 0 : i32
    %c0_i32_0 = arith.constant 0 : i32
    %c0_i32_1 = arith.constant 0 : i32
    return %c0_i32, %c0_i32_0 : i32, i32
  }
  func.func @transform_3(%arg0: i32) -> (i32, i32) {
    %c0_i32 = arith.constant 0 : i32
    %c0_i32_0 = arith.constant 0 : i32
    %c0_i32_1 = arith.constant 0 : i32
    return %c0_i32, %c0_i32_0 : i32, i32
  }
  func.func @transform_4(%arg0: i32) -> (i32, i32) {
    %c0_i32 = arith.constant 0 : i32
    %c0_i32_0 = arith.constant 0 : i32
    %c0_i32_1 = arith.constant 0 : i32
    return %c0_i32, %c0_i32_0 : i32, i32
  }
  func.func @transform_5(%arg0: i32) -> (i32, i32) {
    %c0_i32 = arith.constant 0 : i32
    %c0_i32_0 = arith.constant 0 : i32
    %c0_i32_1 = arith.constant 0 : i32
    return %c0_i32, %c0_i32_0 : i32, i32
  }
  func.func @transform_6(%arg0: i32) -> (i32, i32) {
    %c0_i32 = arith.constant 0 : i32
    %c0_i32_0 = arith.constant 0 : i32
    return %arg0, %c0_i32 : i32, i32
  }
}

</mosaic_0001>

<llo_original>
// kernel: residual_block.5
$region0: #{residual_block.5}
  #allocation0 [shape = 'u32[]', space=smem, size = 0x4, offset = 0x4, fixed_abs, tag = 'smem constant byte address 0x4 - core index']
  #allocation1 [shape = 'u32[144,128]{1,0:T(1,128)}', space=vmem, size = 0x12000, scoped, tag = 'internal scratch']
  %s0 = inlined_call_operand.vmem [shape: f32[256,128], index: 0, kind: input, shape index: {}]
  %s1 = inlined_call_operand.vmem [shape: f32[256,128], index: 1, kind: input, shape index: {}]
  %s2 = inlined_call_operand.vmem [shape: f32[1,128], index: 2, kind: input, shape index: {}]
  %s3 = inlined_call_operand.vmem [shape: f32[1,128], index: 3, kind: input, shape index: {}]
  %s4 = inlined_call_operand.vmem [shape: f32[1,128], index: 4, kind: input, shape index: {}]
  %s5 = inlined_call_operand.vmem [shape: f32[1,128], index: 5, kind: input, shape index: {}]
  %s6 = inlined_call_operand.vmem [shape: f32[256,128], index: 6, kind: output, shape index: {}]
  %s7 = sld [smem:[#allocation0]]
  $region57: #{residual_block.5} parent=0
    _
  %s9 = ssub.s32 1, %s7
  %s10 = scalar_select 0, %s9, %s7
  loop: start=0, step=1, limit=4
  $region2: #{residual_block.5} parent=0 // loop_pre_header
    _
  $region3: #{residual_block.5} parent=0 // loop_header
    %s12 = sphi 0, %s16
    %p13 = scmp.ge.s32.totalorder %s12, 4
    %s22 = sphi 0, %s24
    %s25 = sphi 0, %s22
    %s26 = sphi 0, %s25
    %s42 = sphi 0, %s26
    %s48 = sphi 0, %s50
    %s51 = sphi 0, %s48
    %s52 = sphi 0, %s51
    %s68 = sphi 0, %s52
    %s72 = sphi 0, %s72
    %s74 = sphi 0, %s72
    %s75 = sphi 0, %s74
    %s89 = sphi 0, %s75
    %s93 = sphi 0, %s93
    %s95 = sphi 0, %s93
    %s96 = sphi 0, %s95
    %s110 = sphi 0, %s96
    %s114 = sphi 0, %s114
    %s116 = sphi 0, %s114
    %s117 = sphi 0, %s116
    %s131 = sphi 0, %s117
    %s135 = sphi 0, %s135
    %s137 = sphi 0, %s135
    %s138 = sphi 0, %s137
    %s152 = sphi 0, %s138
    %s158 = sphi 0, %s160
    %s161 = sphi 0, %s158
    %s162 = sphi 0, %s161
    %s178 = sphi 0, %s162
  $region4: #{residual_block.5} parent=0 // loop_header_branch
    %15 = sbr.rel (%p13) target = $region8
  $region5: #{residual_block.5} parent=0 // loop_body
    %s17 = ssub.s32 %s12, 1
    %s18 = ssub.s32 %s12, 2
    %s19 = sadd.s32 %s12, 1
    %s20 = ssub.s32 %s12, %s19
    %p21 = scmp.eq.s32.totalorder %s20, 0
    %s23 = sadd.s32 %s22, 1
    %s24 = scalar_select %p21, %s22, %s23
    %p27 = pneg %p21
    %p28 = scmp.eq.s32.totalorder %s12, 1
    %p29 = por %p27, %p28
    %p30 = scmp.ne.s32.totalorder %s22, %s25
    %p31 = scmp.eq.s32.totalorder %s12, 0
    %p32 = por %p30, %p31
    %p33 = scmp.ne.s32.totalorder %s22, %s25
    %p34 = scmp.eq.s32.totalorder %s17, 1
    %p35 = por %p33, %p34
    %p36 = scmp.ne.s32.totalorder %s25, %s26
    %p37 = scmp.eq.s32.totalorder %s17, 0
    %p38 = por %p36, %p37
    %p39 = scmp.ne.s32.totalorder %s25, %s26
    %p40 = scmp.eq.s32.totalorder %s18, 1
    %p41 = por %p39, %p40
    %p43 = scmp.ne.s32.totalorder %s26, %s42
    %p44 = scmp.eq.s32.totalorder %s18, 0
    %p45 = por %p43, %p44
    %s46 = ssub.s32 %s12, %s19
    %p47 = scmp.eq.s32.totalorder %s46, 0
    %s49 = sadd.s32 %s48, 1
    %s50 = scalar_select %p47, %s48, %s49
    %p53 = pneg %p47
    %p54 = scmp.eq.s32.totalorder %s12, 1
    %p55 = por %p53, %p54
    %p56 = scmp.ne.s32.totalorder %s48, %s51
    %p57 = scmp.eq.s32.totalorder %s12, 0
    %p58 = por %p56, %p57
    %p59 = scmp.ne.s32.totalorder %s48, %s51
    %p60 = scmp.eq.s32.totalorder %s17, 1
    %p61 = por %p59, %p60
    %p62 = scmp.ne.s32.totalorder %s51, %s52
    %p63 = scmp.eq.s32.totalorder %s17, 0
    %p64 = por %p62, %p63
    %p65 = scmp.ne.s32.totalorder %s51, %s52
    %p66 = scmp.eq.s32.totalorder %s18, 1
    %p67 = por %p65, %p66
    %p69 = scmp.ne.s32.totalorder %s52, %s68
    %p70 = scmp.eq.s32.totalorder %s18, 0
    %p71 = por %p69, %p70
    %s73 = sadd.s32 %s72, 1
    %p76 = scmp.eq.s32.totalorder %s12, 1
    %p77 = scmp.ne.s32.totalorder %s72, %s74
    %p78 = scmp.eq.s32.totalorder %s12, 0
    %p79 = por %p77, %p78
    %p80 = scmp.ne.s32.totalorder %s72, %s74
    %p81 = scmp.eq.s32.totalorder %s17, 1
    %p82 = por %p80, %p81
    %p83 = scmp.ne.s32.totalorder %s74, %s75
    %p84 = scmp.eq.s32.totalorder %s17, 0
    %p85 = por %p83, %p84
    %p86 = scmp.ne.s32.totalorder %s74, %s75
    %p87 = scmp.eq.s32.totalorder %s18, 1
    %p88 = por %p86, %p87
    %p90 = scmp.ne.s32.totalorder %s75, %s89
    %p91 = scmp.eq.s32.totalorder %s18, 0
    %p92 = por %p90, %p91
    %s94 = sadd.s32 %s93, 1
    %p97 = scmp.eq.s32.totalorder %s12, 1
    %p98 = scmp.ne.s32.totalorder %s93, %s95
    %p99 = scmp.eq.s32.totalorder %s12, 0
    %p100 = por %p98, %p99
    %p101 = scmp.ne.s32.totalorder %s93, %s95
    %p102 = scmp.eq.s32.totalorder %s17, 1
    %p103 = por %p101, %p102
    %p104 = scmp.ne.s32.totalorder %s95, %s96
    %p105 = scmp.eq.s32.totalorder %s17, 0
    %p106 = por %p104, %p105
    %p107 = scmp.ne.s32.totalorder %s95, %s96
    %p108 = scmp.eq.s32.totalorder %s18, 1
    %p109 = por %p107, %p108
    %p111 = scmp.ne.s32.totalorder %s96, %s110
    %p112 = scmp.eq.s32.totalorder %s18, 0
    %p113 = por %p111, %p112
    %s115 = sadd.s32 %s114, 1
    %p118 = scmp.eq.s32.totalorder %s12, 1
    %p119 = scmp.ne.s32.totalorder %s114, %s116
    %p120 = scmp.eq.s32.totalorder %s12, 0
    %p121 = por %p119, %p120
    %p122 = scmp.ne.s32.totalorder %s114, %s116
    %p123 = scmp.eq.s32.totalorder %s17, 1
    %p124 = por %p122, %p123
    %p125 = scmp.ne.s32.totalorder %s116, %s117
    %p126 = scmp.eq.s32.totalorder %s17, 0
    %p127 = por %p125, %p126
    %p128 = scmp.ne.s32.totalorder %s116, %s117
    %p129 = scmp.eq.s32.totalorder %s18, 1
    %p130 = por %p128, %p129
    %p132 = scmp.ne.s32.totalorder %s117, %s131
    %p133 = scmp.eq.s32.totalorder %s18, 0
    %p134 = por %p132, %p133
    %s136 = sadd.s32 %s135, 1
    %p139 = scmp.eq.s32.totalorder %s12, 1
    %p140 = scmp.ne.s32.totalorder %s135, %s137
    %p141 = scmp.eq.s32.totalorder %s12, 0
    %p142 = por %p140, %p141
    %p143 = scmp.ne.s32.totalorder %s135, %s137
    %p144 = scmp.eq.s32.totalorder %s17, 1
    %p145 = por %p143, %p144
    %p146 = scmp.ne.s32.totalorder %s137, %s138
    %p147 = scmp.eq.s32.totalorder %s17, 0
    %p148 = por %p146, %p147
    %p149 = scmp.ne.s32.totalorder %s137, %s138
    %p150 = scmp.eq.s32.totalorder %s18, 1
    %p151 = por %p149, %p150
    %p153 = scmp.ne.s32.totalorder %s138, %s152
    %p154 = scmp.eq.s32.totalorder %s18, 0
    %p155 = por %p153, %p154
    %s156 = ssub.s32 %s12, %s19
    %p157 = scmp.eq.s32.totalorder %s156, 0
    %s159 = sadd.s32 %s158, 1
    %s160 = scalar_select %p157, %s158, %s159
    %p163 = pneg %p157
    %p164 = scmp.eq.s32.totalorder %s12, 1
    %p165 = por %p163, %p164
    %p166 = scmp.ne.s32.totalorder %s158, %s161
    %p167 = scmp.eq.s32.totalorder %s12, 0
    %p168 = por %p166, %p167
    %p169 = scmp.ne.s32.totalorder %s158, %s161
    %p170 = scmp.eq.s32.totalorder %s17, 1
    %p171 = por %p169, %p170
    %p172 = scmp.ne.s32.totalorder %s161, %s162
    %p173 = scmp.eq.s32.totalorder %s17, 0
    %p174 = por %p172, %p173
    %p175 = scmp.ne.s32.totalorder %s161, %s162
    %p176 = scmp.eq.s32.totalorder %s18, 1
    %p177 = por %p175, %p176
    %p179 = scmp.ne.s32.totalorder %s162, %s178
    %p180 = scmp.eq.s32.totalorder %s18, 0
    %p181 = por %p179, %p180
    %p182 = scmp.le.s32.totalorder 1, %s12
    %p183 = scmp.lt.s32.totalorder %s12, 3
    %p184 = pnand %p182, %p183
    %p185 = pneg %p184
    // Predicated region
    $region9: #{residual_block.5} parent=5 // pred_check
      _
    $region10: #{residual_block.5} parent=5 // pred_check_branch
      %187 = sbr.rel (%p184) target = $region12
    $region11: #{residual_block.5} parent=5 // pred_region
      %s188 = ssub.s32 %s12, 1
      // Predicated region
      $region13: #{residual_block.5} parent=11 // pred_check
        %p189 = pneg %p85
      $region14: #{residual_block.5} parent=11 // pred_check_branch
        %191 = sbr.rel (%p189) target = $region16
      $region15: #{residual_block.5} parent=11 // pred_region
        _
      $region16: #{residual_block.5} parent=11 // pred_fallthru
        _
      // Predicated region
      $region17: #{residual_block.5} parent=11 // pred_check
        %p192 = pneg %p106
      $region18: #{residual_block.5} parent=11 // pred_check_branch
        %194 = sbr.rel (%p192) target = $region20
      $region19: #{residual_block.5} parent=11 // pred_region
        _
      $region20: #{residual_block.5} parent=11 // pred_fallthru
        _
      // Predicated region
      $region21: #{residual_block.5} parent=11 // pred_check
        %p195 = pneg %p127
      $region22: #{residual_block.5} parent=11 // pred_check_branch
        %197 = sbr.rel (%p195) target = $region24
      $region23: #{residual_block.5} parent=11 // pred_region
        _
      $region24: #{residual_block.5} parent=11 // pred_fallthru
        _
      // Predicated region
      $region25: #{residual_block.5} parent=11 // pred_check
        %p198 = pneg %p148
      $region26: #{residual_block.5} parent=11 // pred_check_branch
        %200 = sbr.rel (%p198) target = $region28
      $region27: #{residual_block.5} parent=11 // pred_region
        _
      $region28: #{residual_block.5} parent=11 // pred_fallthru
        _
    $region12: #{residual_block.5} parent=5 // pred_fallthru
      _
    %p201 = scmp.lt.s32.totalorder %s12, 2
    // Predicated region
    $region29: #{residual_block.5} parent=5 // pred_check
      %p202 = pneg %p201
    $region30: #{residual_block.5} parent=5 // pred_check_branch
      %204 = sbr.rel (%p202) target = $region32
    $region31: #{residual_block.5} parent=5 // pred_region
      // Predicated region
      $region33: #{residual_block.5} parent=31 // pred_check
        %p205 = pneg %p32
      $region34: #{residual_block.5} parent=31 // pred_check_branch
        %207 = sbr.rel (%p205) target = $region36
      $region35: #{residual_block.5} parent=31 // pred_region
        %s208 = smul.u32 16, %s12
        %p209 = scmp.lt.s32.totalorder %s208, 31
        %s210 = scalar_select %p209, %s208, 31
        %s211 = smul.addr %s210, 8
        %s212 = scalar_lea.vmem %s0, %s211
        %s213 = smul.u32 16, %s12
      $region36: #{residual_block.5} parent=31 // pred_fallthru
        _
      // Predicated region
      $region37: #{residual_block.5} parent=31 // pred_check
        %p214 = pneg %p58
      $region38: #{residual_block.5} parent=31 // pred_check_branch
        %216 = sbr.rel (%p214) target = $region40
      $region39: #{residual_block.5} parent=31 // pred_region
        %s217 = smul.u32 16, %s12
        %p218 = scmp.lt.s32.totalorder %s217, 31
        %s219 = scalar_select %p218, %s217, 31
        %s220 = smul.addr %s219, 8
        %s221 = scalar_lea.vmem %s1, %s220
        %s222 = smul.u32 16, %s12
      $region40: #{residual_block.5} parent=31 // pred_fallthru
        _
    $region32: #{residual_block.5} parent=5 // pred_fallthru
      _
    %p223 = scmp.le.s32.totalorder 1, %s12
    %p224 = scmp.lt.s32.totalorder %s12, 3
    %p225 = pnand %p223, %p224
    %p226 = pneg %p225
    // Predicated region
    $region41: #{residual_block.5} parent=5 // pred_check
      _
    $region42: #{residual_block.5} parent=5 // pred_check_branch
      %228 = sbr.rel (%p225) target = $region44
    $region43: #{residual_block.5} parent=5 // pred_region
      %s229 = ssub.s32 %s12, 1
      %s230 = smul.u32 16, %s17
      %p231 = scmp.lt.s32.totalorder %s230, 31
      %s232 = scalar_select %p231, %s230, 31
      %s233 = smul.addr %s232, 8
      %s234 = scalar_lea.vmem %s0, %s233
      %p235 = pneg %p38
      %p236 = pneg %p35
      %s237 = smul.u32 16, %s17
      %p238 = scmp.lt.s32.totalorder %s237, 31
      %s239 = scalar_select %p238, %s237, 31
      %s240 = smul.addr %s239, 8
      %s241 = scalar_lea.vmem %s1, %s240
      %p242 = pneg %p64
      %p243 = pneg %p61
      %p244 = pneg %p85
      %p245 = pneg %p82
      %p246 = pneg %p106
      %p247 = pneg %p103
      %p248 = pneg %p127
      %p249 = pneg %p124
      %p250 = pneg %p148
      %p251 = pneg %p145
      %p252 = pneg %p174
      %p253 = pneg %p171
      %s254 = smul.u32 16, %s17
      %p255 = scmp.lt.s32.totalorder %s254, 31
      %s256 = scalar_select %p255, %s254, 31
      %s257 = smul.addr %s256, 8
      %s258 = scalar_lea.vmem %s6, %s257
      %s259 = smul.u32 16, %s17
      %p260 = scmp.lt.s32.totalorder %s259, 31
      %s261 = scalar_select %p260, %s259, 31
      %s262 = smul.addr %s261, 8
      %s263 = scalar_lea.vmem %s0, %s262
      %s264 = smul.u32 16, %s17
      %s265 = smul.u32 16, %s17
      %p266 = scmp.lt.s32.totalorder %s265, 31
      %s267 = scalar_select %p266, %s265, 31
      %s268 = smul.addr %s267, 8
      %s269 = scalar_lea.vmem %s1, %s268
      %s270 = smul.u32 16, %s17
      %s271 = smul.u32 16, %s17
      %p272 = scmp.lt.s32.totalorder %s271, 31
      %s273 = scalar_select %p272, %s271, 31
      %s274 = smul.addr %s273, 8
      %s275 = scalar_lea.vmem %s6, %s274
      %s276 = smul.u32 16, %s17
      %v277 = vld [vmem:[%s263] sm:$0xff]
      %v278 = vld [vmem:[%s263 + $0x8] sm:$0xff]
      %v279 = vld [vmem:[%s263 + $0x10] sm:$0xff]
      %v280 = vld [vmem:[%s263 + $0x18] sm:$0xff]
      %v281 = vld [vmem:[%s263 + $0x20] sm:$0xff]
      %v282 = vld [vmem:[%s263 + $0x28] sm:$0xff]
      %v283 = vld [vmem:[%s263 + $0x30] sm:$0xff]
      %v284 = vld [vmem:[%s263 + $0x38] sm:$0xff]
      %v285 = vld [vmem:[%s263 + $0x40] sm:$0xff]
      %v286 = vld [vmem:[%s263 + $0x48] sm:$0xff]
      %v287 = vld [vmem:[%s263 + $0x50] sm:$0xff]
      %v288 = vld [vmem:[%s263 + $0x58] sm:$0xff]
      %v289 = vld [vmem:[%s263 + $0x60] sm:$0xff]
      %v290 = vld [vmem:[%s263 + $0x68] sm:$0xff]
      %v291 = vld [vmem:[%s263 + $0x70] sm:$0xff]
      %v292 = vld [vmem:[%s263 + $0x78] sm:$0xff]
      %v293 = vld [vmem:[%s2] sm:$0x1]
      %v295 = vlaneseq
      %v296 = vshrl.u32 %v295, 7
      %v297 = vsub.s32 0, %v296
      %v298 = vrot.slane %v293, %v297
      %v300 = vmul.f32 %v277, %v298
      %v301 = vmul.f32 %v278, %v298
      %v302 = vmul.f32 %v279, %v298
      %v303 = vmul.f32 %v280, %v298
      %v304 = vmul.f32 %v281, %v298
      %v305 = vmul.f32 %v282, %v298
      %v306 = vmul.f32 %v283, %v298
      %v307 = vmul.f32 %v284, %v298
      %v308 = vmul.f32 %v285, %v298
      %v309 = vmul.f32 %v286, %v298
      %v310 = vmul.f32 %v287, %v298
      %v311 = vmul.f32 %v288, %v298
      %v312 = vmul.f32 %v289, %v298
      %v313 = vmul.f32 %v290, %v298
      %v314 = vmul.f32 %v291, %v298
      %v315 = vmul.f32 %v292, %v298
      %v316 = vld [vmem:[%s3] sm:$0x1]
      %v318 = vlaneseq
      %v319 = vshrl.u32 %v318, 7
      %v320 = vsub.s32 0, %v319
      %v321 = vrot.slane %v316, %v320
      %v323 = vadd.f32 %v300, %v321
      %v324 = vadd.f32 %v301, %v321
      %v325 = vadd.f32 %v302, %v321
      %v326 = vadd.f32 %v303, %v321
      %v327 = vadd.f32 %v304, %v321
      %v328 = vadd.f32 %v305, %v321
      %v329 = vadd.f32 %v306, %v321
      %v330 = vadd.f32 %v307, %v321
      %v331 = vadd.f32 %v308, %v321
      %v332 = vadd.f32 %v309, %v321
      %v333 = vadd.f32 %v310, %v321
      %v334 = vadd.f32 %v311, %v321
      %v335 = vadd.f32 %v312, %v321
      %v336 = vadd.f32 %v313, %v321
      %v337 = vadd.f32 %v314, %v321
      %v338 = vadd.f32 %v315, %v321
      %v339 = vld [vmem:[%s269] sm:$0xff]
      %v340 = vld [vmem:[%s269 + $0x8] sm:$0xff]
      %v341 = vld [vmem:[%s269 + $0x10] sm:$0xff]
      %v342 = vld [vmem:[%s269 + $0x18] sm:$0xff]
      %v343 = vld [vmem:[%s269 + $0x20] sm:$0xff]
      %v344 = vld [vmem:[%s269 + $0x28] sm:$0xff]
      %v345 = vld [vmem:[%s269 + $0x30] sm:$0xff]
      %v346 = vld [vmem:[%s269 + $0x38] sm:$0xff]
      %v347 = vld [vmem:[%s269 + $0x40] sm:$0xff]
      %v348 = vld [vmem:[%s269 + $0x48] sm:$0xff]
      %v349 = vld [vmem:[%s269 + $0x50] sm:$0xff]
      %v350 = vld [vmem:[%s269 + $0x58] sm:$0xff]
      %v351 = vld [vmem:[%s269 + $0x60] sm:$0xff]
      %v352 = vld [vmem:[%s269 + $0x68] sm:$0xff]
      %v353 = vld [vmem:[%s269 + $0x70] sm:$0xff]
      %v354 = vld [vmem:[%s269 + $0x78] sm:$0xff]
      %v355 = vld [vmem:[%s4] sm:$0x1]
      %v357 = vlaneseq
      %v358 = vshrl.u32 %v357, 7
      %v359 = vsub.s32 0, %v358
      %v360 = vrot.slane %v355, %v359
      %v362 = vmul.f32 %v339, %v360
      %v363 = vmul.f32 %v340, %v360
      %v364 = vmul.f32 %v341, %v360
      %v365 = vmul.f32 %v342, %v360
      %v366 = vmul.f32 %v343, %v360
      %v367 = vmul.f32 %v344, %v360
      %v368 = vmul.f32 %v345, %v360
      %v369 = vmul.f32 %v346, %v360
      %v370 = vmul.f32 %v347, %v360
      %v371 = vmul.f32 %v348, %v360
      %v372 = vmul.f32 %v349, %v360
      %v373 = vmul.f32 %v350, %v360
      %v374 = vmul.f32 %v351, %v360
      %v375 = vmul.f32 %v352, %v360
      %v376 = vmul.f32 %v353, %v360
      %v377 = vmul.f32 %v354, %v360
      %v378 = vld [vmem:[%s5] sm:$0x1]
      %v380 = vlaneseq
      %v381 = vshrl.u32 %v380, 7
      %v382 = vsub.s32 0, %v381
      %v383 = vrot.slane %v378, %v382
      %v385 = vadd.f32 %v362, %v383
      %v386 = vadd.f32 %v363, %v383
      %v387 = vadd.f32 %v364, %v383
      %v388 = vadd.f32 %v365, %v383
      %v389 = vadd.f32 %v366, %v383
      %v390 = vadd.f32 %v367, %v383
      %v391 = vadd.f32 %v368, %v383
      %v392 = vadd.f32 %v369, %v383
      %v393 = vadd.f32 %v370, %v383
      %v394 = vadd.f32 %v371, %v383
      %v395 = vadd.f32 %v372, %v383
      %v396 = vadd.f32 %v373, %v383
      %v397 = vadd.f32 %v374, %v383
      %v398 = vadd.f32 %v375, %v383
      %v399 = vadd.f32 %v376, %v383
      %v400 = vadd.f32 %v377, %v383
      %v401 = vadd.f32 %v385, %v323
      %v402 = vadd.f32 %v386, %v324
      %v403 = vadd.f32 %v387, %v325
      %v404 = vadd.f32 %v388, %v326
      %v405 = vadd.f32 %v389, %v327
      %v406 = vadd.f32 %v390, %v328
      %v407 = vadd.f32 %v391, %v329
      %v408 = vadd.f32 %v392, %v330
      %v409 = vadd.f32 %v393, %v331
      %v410 = vadd.f32 %v394, %v332
      %v411 = vadd.f32 %v395, %v333
      %v412 = vadd.f32 %v396, %v334
      %v413 = vadd.f32 %v397, %v335
      %v414 = vadd.f32 %v398, %v336
      %v415 = vadd.f32 %v399, %v337
      %v416 = vadd.f32 %v400, %v338
      %417 = vst [vmem:[%s275] sm:$0xff] %v401
      %418 = vst [vmem:[%s275 + $0x8] sm:$0xff] %v402
      %419 = vst [vmem:[%s275 + $0x10] sm:$0xff] %v403
      %420 = vst [vmem:[%s275 + $0x18] sm:$0xff] %v404
      %421 = vst [vmem:[%s275 + $0x20] sm:$0xff] %v405
      %422 = vst [vmem:[%s275 + $0x28] sm:$0xff] %v406
      %423 = vst [vmem:[%s275 + $0x30] sm:$0xff] %v407
      %424 = vst [vmem:[%s275 + $0x38] sm:$0xff] %v408
      %425 = vst [vmem:[%s275 + $0x40] sm:$0xff] %v409
      %426 = vst [vmem:[%s275 + $0x48] sm:$0xff] %v410
      %427 = vst [vmem:[%s275 + $0x50] sm:$0xff] %v411
      %428 = vst [vmem:[%s275 + $0x58] sm:$0xff] %v412
      %429 = vst [vmem:[%s275 + $0x60] sm:$0xff] %v413
      %430 = vst [vmem:[%s275 + $0x68] sm:$0xff] %v414
      %431 = vst [vmem:[%s275 + $0x70] sm:$0xff] %v415
      %432 = vst [vmem:[%s275 + $0x78] sm:$0xff] %v416
      %s433 = smul.u32 16, %s17
      %p434 = scmp.lt.s32.totalorder %s433, 31
      %s435 = scalar_select %p434, %s433, 31
      %s436 = smul.addr %s435, 8
      %s437 = scalar_lea.vmem %s6, %s436
      // Predicated region
      $region45: #{residual_block.5} parent=43 // pred_check
        %p438 = pneg %p171
      $region46: #{residual_block.5} parent=43 // pred_check_branch
        %440 = sbr.rel (%p438) target = $region48
      $region47: #{residual_block.5} parent=43 // pred_region
        %s441 = smul.u32 16, %s17
      $region48: #{residual_block.5} parent=43 // pred_fallthru
        _
    $region44: #{residual_block.5} parent=5 // pred_fallthru
      _
    %p442 = scmp.le.s32.totalorder 2, %s12
    // Predicated region
    $region49: #{residual_block.5} parent=5 // pred_check
      %p443 = pneg %p442
    $region50: #{residual_block.5} parent=5 // pred_check_branch
      %445 = sbr.rel (%p443) target = $region52
    $region51: #{residual_block.5} parent=5 // pred_region
      %s446 = ssub.s32 %s12, 2
      // Predicated region
      $region53: #{residual_block.5} parent=51 // pred_check
        %p447 = pneg %p177
      $region54: #{residual_block.5} parent=51 // pred_check_branch
        %449 = sbr.rel (%p447) target = $region56
      $region55: #{residual_block.5} parent=51 // pred_region
        %s450 = smul.u32 16, %s18
        %p451 = scmp.lt.s32.totalorder %s450, 31
        %s452 = scalar_select %p451, %s450, 31
        %s453 = smul.addr %s452, 8
        %s454 = scalar_lea.vmem %s6, %s453
      $region56: #{residual_block.5} parent=51 // pred_fallthru
        _
    $region52: #{residual_block.5} parent=5 // pred_fallthru
      _
  $region6: #{residual_block.5} parent=0 // loop_footer
    %s16 = sadd.s32 1, %s12
  $region7: #{residual_block.5} parent=0 // loop_footer_branch
    %11 = sbr.rel target = $region3
  $region8: #{residual_block.5} parent=0 // loop_exit
    _

// kernel: residual_block.3
$region0: #{residual_block.3}
  #allocation0 [shape = 'u32[]', space=smem, size = 0x4, offset = 0x4, fixed_abs, tag = 'smem constant byte address 0x4 - core index']
  #allocation1 [shape = 'u32[144,128]{1,0:T(1,128)}', space=vmem, size = 0x12000, scoped, tag = 'internal scratch']
  %s0 = inlined_call_operand.vmem [shape: bf16[256,64], index: 0, kind: input, shape index: {}]
  %s1 = inlined_call_operand.vmem [shape: bf16[64,128], index: 1, kind: input, shape index: {}]
  %s2 = inlined_call_operand.vmem [shape: f32[1,128], index: 2, kind: input, shape index: {}]
  %s3 = inlined_call_operand.vmem [shape: bf16[64,128], index: 3, kind: input, shape index: {}]
  %s4 = inlined_call_operand.vmem [shape: f32[1,128], index: 4, kind: input, shape index: {}]
  %s5 = inlined_call_operand.vmem [shape: f32[256,128], index: 5, kind: output, shape index: {0}]
  %s6 = inlined_call_operand.vmem [shape: f32[256,128], index: 6, kind: output, shape index: {1}]
  %s7 = inlined_call_operand.vmem [shape: f32[16,128], index: 7, kind: output, shape index: {2}]
  %8 = xla_tuple %s5, %s6, %s7
  %s9 = sld [smem:[#allocation0]]
  $region69: #{residual_block.3} parent=0
    _
  %s11 = ssub.s32 1, %s9
  %s12 = scalar_select 0, %s11, %s9
  loop: start=0, step=1, limit=4
  $region2: #{residual_block.3} parent=0 // loop_pre_header
    _
  $region3: #{residual_block.3} parent=0 // loop_header
    %s14 = sphi 0, %s18
    %p15 = scmp.ge.s32.totalorder %s14, 4
    %s24 = sphi 0, %s26
    %s27 = sphi 0, %s24
    %s28 = sphi 0, %s27
    %s44 = sphi 0, %s28
    %s48 = sphi 0, %s48
    %s50 = sphi 0, %s48
    %s51 = sphi 0, %s50
    %s65 = sphi 0, %s51
    %s69 = sphi 0, %s69
    %s71 = sphi 0, %s69
    %s72 = sphi 0, %s71
    %s86 = sphi 0, %s72
    %s90 = sphi 0, %s90
    %s92 = sphi 0, %s90
    %s93 = sphi 0, %s92
    %s107 = sphi 0, %s93
    %s111 = sphi 0, %s111
    %s113 = sphi 0, %s111
    %s114 = sphi 0, %s113
    %s128 = sphi 0, %s114
    %s134 = sphi 0, %s136
    %s137 = sphi 0, %s134
    %s138 = sphi 0, %s137
    %s154 = sphi 0, %s138
    %s160 = sphi 0, %s162
    %s163 = sphi 0, %s160
    %s164 = sphi 0, %s163
    %s180 = sphi 0, %s164
    %s186 = sphi 0, %s188
    %s189 = sphi 0, %s186
    %s190 = sphi 0, %s189
    %s206 = sphi 0, %s190
  $region4: #{residual_block.3} parent=0 // loop_header_branch
    %17 = sbr.rel (%p15) target = $region8
  $region5: #{residual_block.3} parent=0 // loop_body
    %s19 = ssub.s32 %s14, 1
    %s20 = ssub.s32 %s14, 2
    %s21 = sadd.s32 %s14, 1
    %s22 = ssub.s32 %s14, %s21
    %p23 = scmp.eq.s32.totalorder %s22, 0
    %s25 = sadd.s32 %s24, 1
    %s26 = scalar_select %p23, %s24, %s25
    %p29 = pneg %p23
    %p30 = scmp.eq.s32.totalorder %s14, 1
    %p31 = por %p29, %p30
    %p32 = scmp.ne.s32.totalorder %s24, %s27
    %p33 = scmp.eq.s32.totalorder %s14, 0
    %p34 = por %p32, %p33
    %p35 = scmp.ne.s32.totalorder %s24, %s27
    %p36 = scmp.eq.s32.totalorder %s19, 1
    %p37 = por %p35, %p36
    %p38 = scmp.ne.s32.totalorder %s27, %s28
    %p39 = scmp.eq.s32.totalorder %s19, 0
    %p40 = por %p38, %p39
    %p41 = scmp.ne.s32.totalorder %s27, %s28
    %p42 = scmp.eq.s32.totalorder %s20, 1
    %p43 = por %p41, %p42
    %p45 = scmp.ne.s32.totalorder %s28, %s44
    %p46 = scmp.eq.s32.totalorder %s20, 0
    %p47 = por %p45, %p46
    %s49 = sadd.s32 %s48, 1
    %p52 = scmp.eq.s32.totalorder %s14, 1
    %p53 = scmp.ne.s32.totalorder %s48, %s50
    %p54 = scmp.eq.s32.totalorder %s14, 0
    %p55 = por %p53, %p54
    %p56 = scmp.ne.s32.totalorder %s48, %s50
    %p57 = scmp.eq.s32.totalorder %s19, 1
    %p58 = por %p56, %p57
    %p59 = scmp.ne.s32.totalorder %s50, %s51
    %p60 = scmp.eq.s32.totalorder %s19, 0
    %p61 = por %p59, %p60
    %p62 = scmp.ne.s32.totalorder %s50, %s51
    %p63 = scmp.eq.s32.totalorder %s20, 1
    %p64 = por %p62, %p63
    %p66 = scmp.ne.s32.totalorder %s51, %s65
    %p67 = scmp.eq.s32.totalorder %s20, 0
    %p68 = por %p66, %p67
    %s70 = sadd.s32 %s69, 1
    %p73 = scmp.eq.s32.totalorder %s14, 1
    %p74 = scmp.ne.s32.totalorder %s69, %s71
    %p75 = scmp.eq.s32.totalorder %s14, 0
    %p76 = por %p74, %p75
    %p77 = scmp.ne.s32.totalorder %s69, %s71
    %p78 = scmp.eq.s32.totalorder %s19, 1
    %p79 = por %p77, %p78
    %p80 = scmp.ne.s32.totalorder %s71, %s72
    %p81 = scmp.eq.s32.totalorder %s19, 0
    %p82 = por %p80, %p81
    %p83 = scmp.ne.s32.totalorder %s71, %s72
    %p84 = scmp.eq.s32.totalorder %s20, 1
    %p85 = por %p83, %p84
    %p87 = scmp.ne.s32.totalorder %s72, %s86
    %p88 = scmp.eq.s32.totalorder %s20, 0
    %p89 = por %p87, %p88
    %s91 = sadd.s32 %s90, 1
    %p94 = scmp.eq.s32.totalorder %s14, 1
    %p95 = scmp.ne.s32.totalorder %s90, %s92
    %p96 = scmp.eq.s32.totalorder %s14, 0
    %p97 = por %p95, %p96
    %p98 = scmp.ne.s32.totalorder %s90, %s92
    %p99 = scmp.eq.s32.totalorder %s19, 1
    %p100 = por %p98, %p99
    %p101 = scmp.ne.s32.totalorder %s92, %s93
    %p102 = scmp.eq.s32.totalorder %s19, 0
    %p103 = por %p101, %p102
    %p104 = scmp.ne.s32.totalorder %s92, %s93
    %p105 = scmp.eq.s32.totalorder %s20, 1
    %p106 = por %p104, %p105
    %p108 = scmp.ne.s32.totalorder %s93, %s107
    %p109 = scmp.eq.s32.totalorder %s20, 0
    %p110 = por %p108, %p109
    %s112 = sadd.s32 %s111, 1
    %p115 = scmp.eq.s32.totalorder %s14, 1
    %p116 = scmp.ne.s32.totalorder %s111, %s113
    %p117 = scmp.eq.s32.totalorder %s14, 0
    %p118 = por %p116, %p117
    %p119 = scmp.ne.s32.totalorder %s111, %s113
    %p120 = scmp.eq.s32.totalorder %s19, 1
    %p121 = por %p119, %p120
    %p122 = scmp.ne.s32.totalorder %s113, %s114
    %p123 = scmp.eq.s32.totalorder %s19, 0
    %p124 = por %p122, %p123
    %p125 = scmp.ne.s32.totalorder %s113, %s114
    %p126 = scmp.eq.s32.totalorder %s20, 1
    %p127 = por %p125, %p126
    %p129 = scmp.ne.s32.totalorder %s114, %s128
    %p130 = scmp.eq.s32.totalorder %s20, 0
    %p131 = por %p129, %p130
    %s132 = ssub.s32 %s14, %s21
    %p133 = scmp.eq.s32.totalorder %s132, 0
    %s135 = sadd.s32 %s134, 1
    %s136 = scalar_select %p133, %s134, %s135
    %p139 = pneg %p133
    %p140 = scmp.eq.s32.totalorder %s14, 1
    %p141 = por %p139, %p140
    %p142 = scmp.ne.s32.totalorder %s134, %s137
    %p143 = scmp.eq.s32.totalorder %s14, 0
    %p144 = por %p142, %p143
    %p145 = scmp.ne.s32.totalorder %s134, %s137
    %p146 = scmp.eq.s32.totalorder %s19, 1
    %p147 = por %p145, %p146
    %p148 = scmp.ne.s32.totalorder %s137, %s138
    %p149 = scmp.eq.s32.totalorder %s19, 0
    %p150 = por %p148, %p149
    %p151 = scmp.ne.s32.totalorder %s137, %s138
    %p152 = scmp.eq.s32.totalorder %s20, 1
    %p153 = por %p151, %p152
    %p155 = scmp.ne.s32.totalorder %s138, %s154
    %p156 = scmp.eq.s32.totalorder %s20, 0
    %p157 = por %p155, %p156
    %s158 = ssub.s32 %s14, %s21
    %p159 = scmp.eq.s32.totalorder %s158, 0
    %s161 = sadd.s32 %s160, 1
    %s162 = scalar_select %p159, %s160, %s161
    %p165 = pneg %p159
    %p166 = scmp.eq.s32.totalorder %s14, 1
    %p167 = por %p165, %p166
    %p168 = scmp.ne.s32.totalorder %s160, %s163
    %p169 = scmp.eq.s32.totalorder %s14, 0
    %p170 = por %p168, %p169
    %p171 = scmp.ne.s32.totalorder %s160, %s163
    %p172 = scmp.eq.s32.totalorder %s19, 1
    %p173 = por %p171, %p172
    %p174 = scmp.ne.s32.totalorder %s163, %s164
    %p175 = scmp.eq.s32.totalorder %s19, 0
    %p176 = por %p174, %p175
    %p177 = scmp.ne.s32.totalorder %s163, %s164
    %p178 = scmp.eq.s32.totalorder %s20, 1
    %p179 = por %p177, %p178
    %p181 = scmp.ne.s32.totalorder %s164, %s180
    %p182 = scmp.eq.s32.totalorder %s20, 0
    %p183 = por %p181, %p182
    %s184 = ssub.s32 %s14, %s21
    %p185 = scmp.eq.s32.totalorder %s184, 0
    %s187 = sadd.s32 %s186, 1
    %s188 = scalar_select %p185, %s186, %s187
    %p191 = pneg %p185
    %p192 = scmp.eq.s32.totalorder %s14, 1
    %p193 = por %p191, %p192
    %p194 = scmp.ne.s32.totalorder %s186, %s189
    %p195 = scmp.eq.s32.totalorder %s14, 0
    %p196 = por %p194, %p195
    %p197 = scmp.ne.s32.totalorder %s186, %s189
    %p198 = scmp.eq.s32.totalorder %s19, 1
    %p199 = por %p197, %p198
    %p200 = scmp.ne.s32.totalorder %s189, %s190
    %p201 = scmp.eq.s32.totalorder %s19, 0
    %p202 = por %p200, %p201
    %p203 = scmp.ne.s32.totalorder %s189, %s190
    %p204 = scmp.eq.s32.totalorder %s20, 1
    %p205 = por %p203, %p204
    %p207 = scmp.ne.s32.totalorder %s190, %s206
    %p208 = scmp.eq.s32.totalorder %s20, 0
    %p209 = por %p207, %p208
    %p210 = scmp.le.s32.totalorder 1, %s14
    %p211 = scmp.lt.s32.totalorder %s14, 3
    %p212 = pnand %p210, %p211
    %p213 = pneg %p212
    // Predicated region
    $region9: #{residual_block.3} parent=5 // pred_check
      _
    $region10: #{residual_block.3} parent=5 // pred_check_branch
      %215 = sbr.rel (%p212) target = $region12
    $region11: #{residual_block.3} parent=5 // pred_region
      %s216 = ssub.s32 %s14, 1
      // Predicated region
      $region13: #{residual_block.3} parent=11 // pred_check
        %p217 = pneg %p61
      $region14: #{residual_block.3} parent=11 // pred_check_branch
        %219 = sbr.rel (%p217) target = $region16
      $region15: #{residual_block.3} parent=11 // pred_region
        _
      $region16: #{residual_block.3} parent=11 // pred_fallthru
        _
      // Predicated region
      $region17: #{residual_block.3} parent=11 // pred_check
        %p220 = pneg %p82
      $region18: #{residual_block.3} parent=11 // pred_check_branch
        %222 = sbr.rel (%p220) target = $region20
      $region19: #{residual_block.3} parent=11 // pred_region
        _
      $region20: #{residual_block.3} parent=11 // pred_fallthru
        _
      // Predicated region
      $region21: #{residual_block.3} parent=11 // pred_check
        %p223 = pneg %p103
      $region22: #{residual_block.3} parent=11 // pred_check_branch
        %225 = sbr.rel (%p223) target = $region24
      $region23: #{residual_block.3} parent=11 // pred_region
        _
      $region24: #{residual_block.3} parent=11 // pred_fallthru
        _
      // Predicated region
      $region25: #{residual_block.3} parent=11 // pred_check
        %p226 = pneg %p124
      $region26: #{residual_block.3} parent=11 // pred_check_branch
        %228 = sbr.rel (%p226) target = $region28
      $region27: #{residual_block.3} parent=11 // pred_region
        _
      $region28: #{residual_block.3} parent=11 // pred_fallthru
        _
    $region12: #{residual_block.3} parent=5 // pred_fallthru
      _
    %p229 = scmp.lt.s32.totalorder %s14, 2
    // Predicated region
    $region29: #{residual_block.3} parent=5 // pred_check
      %p230 = pneg %p229
    $region30: #{residual_block.3} parent=5 // pred_check_branch
      %232 = sbr.rel (%p230) target = $region32
    $region31: #{residual_block.3} parent=5 // pred_region
      // Predicated region
      $region33: #{residual_block.3} parent=31 // pred_check
        %p233 = pneg %p34
      $region34: #{residual_block.3} parent=31 // pred_check_branch
        %235 = sbr.rel (%p233) target = $region36
      $region35: #{residual_block.3} parent=31 // pred_region
        %s236 = smul.u32 16, %s14
        %p237 = scmp.lt.s32.totalorder %s236, 31
        %s238 = scalar_select %p237, %s236, 31
        %s239 = smul.addr %s238, 4
        %s240 = scalar_lea.vmem %s0, %s239
        %s241 = smul.u32 16, %s14
      $region36: #{residual_block.3} parent=31 // pred_fallthru
        _
    $region32: #{residual_block.3} parent=5 // pred_fallthru
      _
    %p242 = scmp.le.s32.totalorder 1, %s14
    %p243 = scmp.lt.s32.totalorder %s14, 3
    %p244 = pnand %p242, %p243
    %p245 = pneg %p244
    // Predicated region
    $region37: #{residual_block.3} parent=5 // pred_check
      _
    $region38: #{residual_block.3} parent=5 // pred_check_branch
      %247 = sbr.rel (%p244) target = $region40
    $region39: #{residual_block.3} parent=5 // pred_region
      %s248 = ssub.s32 %s14, 1
      %s249 = smul.u32 16, %s19
      %p250 = scmp.lt.s32.totalorder %s249, 31
      %s251 = scalar_select %p250, %s249, 31
      %s252 = smul.addr %s251, 4
      %s253 = scalar_lea.vmem %s0, %s252
      %p254 = pneg %p40
      %p255 = pneg %p37
      %p256 = pneg %p61
      %p257 = pneg %p58
      %p258 = pneg %p82
      %p259 = pneg %p79
      %p260 = pneg %p103
      %p261 = pneg %p100
      %p262 = pneg %p124
      %p263 = pneg %p121
      %p264 = pneg %p150
      %p265 = pneg %p147
      %s266 = smul.u32 16, %s19
      %p267 = scmp.lt.s32.totalorder %s266, 31
      %s268 = scalar_select %p267, %s266, 31
      %s269 = smul.addr %s268, 8
      %s270 = scalar_lea.vmem %s5, %s269
      %p271 = pneg %p176
      %p272 = pneg %p173
      %s273 = smul.u32 16, %s19
      %p274 = scmp.lt.s32.totalorder %s273, 31
      %s275 = scalar_select %p274, %s273, 31
      %s276 = smul.addr %s275, 8
      %s277 = scalar_lea.vmem %s6, %s276
      %p278 = pneg %p202
      %p279 = pneg %p199
      %p280 = scmp.lt.s32.totalorder %s19, 1
      %s281 = scalar_select %p280, %s19, 1
      %s282 = smul.addr %s281, 8
      %s283 = scalar_lea.vmem %s7, %s282
      %s284 = smul.u32 16, %s19
      %p285 = scmp.lt.s32.totalorder %s284, 31
      %s286 = scalar_select %p285, %s284, 31
      %s287 = smul.addr %s286, 4
      %s288 = scalar_lea.vmem %s0, %s287
      %s289 = smul.u32 16, %s19
      %s290 = smul.u32 16, %s19
      %p291 = scmp.lt.s32.totalorder %s290, 31
      %s292 = scalar_select %p291, %s290, 31
      %s293 = smul.addr %s292, 8
      %s294 = scalar_lea.vmem %s5, %s293
      %s295 = smul.u32 16, %s19
      %s296 = smul.u32 16, %s19
      %p297 = scmp.lt.s32.totalorder %s296, 31
      %s298 = scalar_select %p297, %s296, 31
      %s299 = smul.addr %s298, 8
      %s300 = scalar_lea.vmem %s6, %s299
      %s301 = smul.u32 16, %s19
      %p302 = scmp.lt.s32.totalorder %s19, 1
      %s303 = scalar_select %p302, %s19, 1
      %s304 = smul.addr %s303, 8
      %s305 = scalar_lea.vmem %s7, %s304
      %v307 = vld [vmem:[%s288] sm:$0xf]
      %v308 = vld [vmem:[%s288 + $0x4] sm:$0xf]
      %v309 = vld [vmem:[%s288 + $0x8] sm:$0xf]
      %v310 = vld [vmem:[%s288 + $0xc] sm:$0xf]
      %v311 = vld [vmem:[%s288 + $0x10] sm:$0xf]
      %v312 = vld [vmem:[%s288 + $0x14] sm:$0xf]
      %v313 = vld [vmem:[%s288 + $0x18] sm:$0xf]
      %v314 = vld [vmem:[%s288 + $0x1c] sm:$0xf]
      %v315 = vld [vmem:[%s288 + $0x20] sm:$0xf]
      %v316 = vld [vmem:[%s288 + $0x24] sm:$0xf]
      %v317 = vld [vmem:[%s288 + $0x28] sm:$0xf]
      %v318 = vld [vmem:[%s288 + $0x2c] sm:$0xf]
      %v319 = vld [vmem:[%s288 + $0x30] sm:$0xf]
      %v320 = vld [vmem:[%s288 + $0x34] sm:$0xf]
      %v321 = vld [vmem:[%s288 + $0x38] sm:$0xf]
      %v322 = vld [vmem:[%s288 + $0x3c] sm:$0xf]
      %v323 = vld [vmem:[%s1] sm:$0xf]
      %v324 = vld [vmem:[%s1 + $0x4] sm:$0xf]
      %v325 = vld [vmem:[%s1 + $0x8] sm:$0xf]
      %v326 = vld [vmem:[%s1 + $0xc] sm:$0xf]
      %v327 = vld [vmem:[%s1 + $0x10] sm:$0xf]
      %v328 = vld [vmem:[%s1 + $0x14] sm:$0xf]
      %v329 = vld [vmem:[%s1 + $0x18] sm:$0xf]
      %v330 = vld [vmem:[%s1 + $0x1c] sm:$0xf]
      %v331 = vld [vmem:[%s2] sm:$0x1]
      %v333 = vlaneseq
      %v334 = vshrl.u32 %v333, 7
      %v335 = vsub.s32 0, %v334
      %v336 = vrot.slane %v331, %v335
      %v354 = vunpack.c.l.b16 %v307
      %v355 = vunpack.c.l.b16 %v308
      %v356 = vunpack.c.l.b16 %v309
      %v357 = vunpack.c.l.b16 %v310
      %v358 = vunpack.c.l.b16 %v311
      %v359 = vunpack.c.l.b16 %v312
      %v360 = vunpack.c.l.b16 %v313
      %v361 = vunpack.c.l.b16 %v314
      %v362 = vunpack.c.l.b16 %v315
      %v363 = vunpack.c.l.b16 %v316
      %v364 = vunpack.c.l.b16 %v317
      %v365 = vunpack.c.l.b16 %v318
      %v366 = vunpack.c.l.b16 %v319
      %v367 = vunpack.c.l.b16 %v320
      %v368 = vunpack.c.l.b16 %v321
      %v369 = vunpack.c.l.b16 %v322
      %v370 = vpack.c.b16 %v355, %v354
      %v371 = vpack.c.b16 %v357, %v356
      %v372 = vpack.c.b16 %v359, %v358
      %v373 = vpack.c.b16 %v361, %v360
      %v374 = vpack.c.b16 %v363, %v362
      %v375 = vpack.c.b16 %v365, %v364
      %v376 = vpack.c.b16 %v367, %v366
      %v377 = vpack.c.b16 %v369, %v368
      %v386 = vunpack.c.l.b16 %v323
      %v387 = vunpack.c.l.b16 %v324
      %v388 = vunpack.c.l.b16 %v325
      %v389 = vunpack.c.l.b16 %v326
      %v390 = vunpack.c.l.b16 %v327
      %v391 = vunpack.c.l.b16 %v328
      %v392 = vunpack.c.l.b16 %v329
      %v393 = vunpack.c.l.b16 %v330
      %v394 = vpack.c.b16 %v387, %v386
      %v395 = vpack.c.b16 %v389, %v388
      %v396 = vpack.c.b16 %v391, %v390
      %v397 = vpack.c.b16 %v393, %v392
      %vm402 = vcmask 523264
      %v404 = vsel %vm402, %v370, 0
      %v407 = vsel %vm402, %v371, 0
      %v410 = vsel %vm402, %v372, 0
      %v413 = vsel %vm402, %v373, 0
      %v416 = vsel %vm402, %v374, 0
      %v419 = vsel %vm402, %v375, 0
      %v422 = vsel %vm402, %v376, 0
      %v425 = vsel %vm402, %v377, 0
      %427 = vmatprep.subr.bf16.mxu0 0
      %428 = vmatpush1.bf16.msra.mxu0 %v394
      %429 = vmatprep.subr.bf16.mxu0 0
      %430 = vmatpush1.bf16.msra.mxu0 %v395
      %431 = vmatprep.subr.bf16.mxu0 0
      %432 = vmatpush1.bf16.msra.mxu0 %v396
      %433 = vmatprep.subr.bf16.mxu0 0
      %434 = vmatpush1.bf16.msra.mxu0 %v397
      %435 = vmatprep.subr.bf16.mxu0 0
      %436 = vmatpush1.bf16.msra.mxu0 0
      %437 = vmatprep.subr.bf16.mxu0 0
      %438 = vmatpush1.bf16.msra.mxu0 0
      %439 = vmatprep.subr.bf16.mxu0 0
      %440 = vmatpush1.bf16.msra.mxu0 0
      %441 = vmatprep.subr.bf16.mxu0 0
      %442 = vmatpush1.bf16.msra.mxu0 0
      %443 = vmatprep.subr.bf16.mxu0 0
      %444 = vmatpush1.bf16.msra.mxu0 0
      %445 = vmatprep.subr.bf16.mxu0 0
      %446 = vmatpush1.bf16.msra.mxu0 0
      %447 = vmatprep.subr.bf16.mxu0 0
      %448 = vmatpush1.bf16.msra.mxu0 0
      %449 = vmatprep.subr.bf16.mxu0 0
      %450 = vmatpush1.bf16.msra.mxu0 0
      %451 = vmatprep.subr.bf16.mxu0 0
      %452 = vmatpush1.bf16.msra.mxu0 0
      %453 = vmatprep.subr.bf16.mxu0 0
      %454 = vmatpush1.bf16.msra.mxu0 0
      %455 = vmatprep.subr.bf16.mxu0 0
      %456 = vmatpush1.bf16.msra.mxu0 0
      %457 = vmatprep.subr.bf16.mxu0 0
      %458 = vmatpush1.bf16.msra.mxu0 0
      %459 = vmatprep.mubr.bf16.mxu0 0
      %460 = vmatmul.mubr.bf16.gmra.mrb[0].mxu0 %v404
      %v461 = vpop.f32.mrb[0].mxu0
      %v462 = vadd.f32 %v336, %v461
      %v463 = vpop.f32.mrb[0].mxu0
      %v464 = vpop.f32.mrb[0].mxu0
      %v465 = vadd.f32 %v336, %v464
      %v466 = vpop.f32.mrb[0].mxu0
      %467 = vmatprep.mubr.bf16.mxu0 0
      %468 = vmatmul.mubr.bf16.gmra.mrb[0].mxu0 %v407
      %v469 = vpop.f32.mrb[0].mxu0
      %v470 = vadd.f32 %v336, %v469
      %v471 = vpop.f32.mrb[0].mxu0
      %v472 = vpop.f32.mrb[0].mxu0
      %v473 = vadd.f32 %v336, %v472
      %v474 = vpop.f32.mrb[0].mxu0
      %475 = vmatprep.mubr.bf16.mxu0 0
      %476 = vmatmul.mubr.bf16.gmra.mrb[0].mxu0 %v410
      %v477 = vpop.f32.mrb[0].mxu0
      %v478 = vadd.f32 %v336, %v477
      %v479 = vpop.f32.mrb[0].mxu0
      %v480 = vpop.f32.mrb[0].mxu0
      %v481 = vadd.f32 %v336, %v480
      %v482 = vpop.f32.mrb[0].mxu0
      %483 = vmatprep.mubr.bf16.mxu0 0
      %484 = vmatmul.mubr.bf16.gmra.mrb[0].mxu0 %v413
      %v485 = vpop.f32.mrb[0].mxu0
      %v486 = vadd.f32 %v336, %v485
      %v487 = vpop.f32.mrb[0].mxu0
      %v488 = vpop.f32.mrb[0].mxu0
      %v489 = vadd.f32 %v336, %v488
      %v490 = vpop.f32.mrb[0].mxu0
      %491 = vmatprep.mubr.bf16.mxu0 0
      %492 = vmatmul.mubr.bf16.gmra.mrb[0].mxu0 %v416
      %v493 = vpop.f32.mrb[0].mxu0
      %v494 = vadd.f32 %v336, %v493
      %v495 = vpop.f32.mrb[0].mxu0
      %v496 = vpop.f32.mrb[0].mxu0
      %v497 = vadd.f32 %v336, %v496
      %v498 = vpop.f32.mrb[0].mxu0
      %499 = vmatprep.mubr.bf16.mxu0 0
      %500 = vmatmul.mubr.bf16.gmra.mrb[0].mxu0 %v419
      %v501 = vpop.f32.mrb[0].mxu0
      %v502 = vadd.f32 %v336, %v501
      %v503 = vpop.f32.mrb[0].mxu0
      %v504 = vpop.f32.mrb[0].mxu0
      %v505 = vadd.f32 %v336, %v504
      %v506 = vpop.f32.mrb[0].mxu0
      %507 = vmatprep.mubr.bf16.mxu0 0
      %508 = vmatmul.mubr.bf16.gmra.mrb[0].mxu0 %v422
      %v509 = vpop.f32.mrb[0].mxu0
      %v510 = vadd.f32 %v336, %v509
      %v511 = vpop.f32.mrb[0].mxu0
      %v512 = vpop.f32.mrb[0].mxu0
      %v513 = vadd.f32 %v336, %v512
      %v514 = vpop.f32.mrb[0].mxu0
      %515 = vmatprep.mubr.bf16.mxu0 0
      %516 = vmatmul.mubr.bf16.gmra.mrb[0].mxu0 %v425
      %v517 = vpop.f32.mrb[0].mxu0
      %v518 = vadd.f32 %v336, %v517
      %v519 = vpop.f32.mrb[0].mxu0
      %v520 = vpop.f32.mrb[0].mxu0
      %v521 = vadd.f32 %v336, %v520
      %v522 = vpop.f32.mrb[0].mxu0
      %523 = vdwg.mxu0
      %v524 = vld [vmem:[%s3] sm:$0xf]
      %v525 = vld [vmem:[%s3 + $0x4] sm:$0xf]
      %v526 = vld [vmem:[%s3 + $0x8] sm:$0xf]
      %v527 = vld [vmem:[%s3 + $0xc] sm:$0xf]
      %v528 = vld [vmem:[%s3 + $0x10] sm:$0xf]
      %v529 = vld [vmem:[%s3 + $0x14] sm:$0xf]
      %v530 = vld [vmem:[%s3 + $0x18] sm:$0xf]
      %v531 = vld [vmem:[%s3 + $0x1c] sm:$0xf]
      %v532 = vld [vmem:[%s4] sm:$0x1]
      %v534 = vlaneseq
      %v535 = vshrl.u32 %v534, 7
      %v536 = vsub.s32 0, %v535
      %v537 = vrot.slane %v532, %v536
      %v547 = vunpack.c.l.b16 %v524
      %v548 = vunpack.c.l.b16 %v525
      %v549 = vunpack.c.l.b16 %v526
      %v550 = vunpack.c.l.b16 %v527
      %v551 = vunpack.c.l.b16 %v528
      %v552 = vunpack.c.l.b16 %v529
      %v553 = vunpack.c.l.b16 %v530
      %v554 = vunpack.c.l.b16 %v531
      %v555 = vpack.c.b16 %v548, %v547
      %v556 = vpack.c.b16 %v550, %v549
      %v557 = vpack.c.b16 %v552, %v551
      %v558 = vpack.c.b16 %v554, %v553
      %563 = vmatprep.subr.bf16.mxu0 0
      %564 = vmatpush1.bf16.msra.mxu0 %v555
      %565 = vmatprep.subr.bf16.mxu0 0
      %566 = vmatpush1.bf16.msra.mxu0 %v556
      %567 = vmatprep.subr.bf16.mxu0 0
      %568 = vmatpush1.bf16.msra.mxu0 %v557
      %569 = vmatprep.subr.bf16.mxu0 0
      %570 = vmatpush1.bf16.msra.mxu0 %v558
      %571 = vmatprep.subr.bf16.mxu0 0
      %572 = vmatpush1.bf16.msra.mxu0 0
      %573 = vmatprep.subr.bf16.mxu0 0
      %574 = vmatpush1.bf16.msra.mxu0 0
      %575 = vmatprep.subr.bf16.mxu0 0
      %576 = vmatpush1.bf16.msra.mxu0 0
      %577 = vmatprep.subr.bf16.mxu0 0
      %578 = vmatpush1.bf16.msra.mxu0 0
      %579 = vmatprep.subr.bf16.mxu0 0
      %580 = vmatpush1.bf16.msra.mxu0 0
      %581 = vmatprep.subr.bf16.mxu0 0
      %582 = vmatpush1.bf16.msra.mxu0 0
      %583 = vmatprep.subr.bf16.mxu0 0
      %584 = vmatpush1.bf16.msra.mxu0 0
      %585 = vmatprep.subr.bf16.mxu0 0
      %586 = vmatpush1.bf16.msra.mxu0 0
      %587 = vmatprep.subr.bf16.mxu0 0
      %588 = vmatpush1.bf16.msra.mxu0 0
      %589 = vmatprep.subr.bf16.mxu0 0
      %590 = vmatpush1.bf16.msra.mxu0 0
      %591 = vmatprep.subr.bf16.mxu0 0
      %592 = vmatpush1.bf16.msra.mxu0 0
      %593 = vmatprep.subr.bf16.mxu0 0
      %594 = vmatpush1.bf16.msra.mxu0 0
      %595 = vmatprep.mubr.bf16.mxu0 0
      %596 = vmatmul.mubr.bf16.gmra.mrb[0].mxu0 %v404
      %v597 = vpop.f32.mrb[0].mxu0
      %v598 = vadd.f32 %v537, %v597
      %v599 = vpop.f32.mrb[0].mxu0
      %v600 = vpop.f32.mrb[0].mxu0
      %v601 = vadd.f32 %v537, %v600
      %v602 = vpop.f32.mrb[0].mxu0
      %603 = vmatprep.mubr.bf16.mxu0 0
      %604 = vmatmul.mubr.bf16.gmra.mrb[0].mxu0 %v407
      %v605 = vpop.f32.mrb[0].mxu0
      %v606 = vadd.f32 %v537, %v605
      %v607 = vpop.f32.mrb[0].mxu0
      %v608 = vpop.f32.mrb[0].mxu0
      %v609 = vadd.f32 %v537, %v608
      %v610 = vpop.f32.mrb[0].mxu0
      %611 = vmatprep.mubr.bf16.mxu0 0
      %612 = vmatmul.mubr.bf16.gmra.mrb[0].mxu0 %v410
      %v613 = vpop.f32.mrb[0].mxu0
      %v614 = vadd.f32 %v537, %v613
      %v615 = vpop.f32.mrb[0].mxu0
      %v616 = vpop.f32.mrb[0].mxu0
      %v617 = vadd.f32 %v537, %v616
      %v618 = vpop.f32.mrb[0].mxu0
      %619 = vmatprep.mubr.bf16.mxu0 0
      %620 = vmatmul.mubr.bf16.gmra.mrb[0].mxu0 %v413
      %v621 = vpop.f32.mrb[0].mxu0
      %v622 = vadd.f32 %v537, %v621
      %v623 = vpop.f32.mrb[0].mxu0
      %v624 = vpop.f32.mrb[0].mxu0
      %v625 = vadd.f32 %v537, %v624
      %v626 = vpop.f32.mrb[0].mxu0
      %627 = vmatprep.mubr.bf16.mxu0 0
      %628 = vmatmul.mubr.bf16.gmra.mrb[0].mxu0 %v416
      %v629 = vpop.f32.mrb[0].mxu0
      %v630 = vadd.f32 %v537, %v629
      %v631 = vpop.f32.mrb[0].mxu0
      %v632 = vpop.f32.mrb[0].mxu0
      %v633 = vadd.f32 %v537, %v632
      %v634 = vpop.f32.mrb[0].mxu0
      %635 = vmatprep.mubr.bf16.mxu0 0
      %636 = vmatmul.mubr.bf16.gmra.mrb[0].mxu0 %v419
      %v637 = vpop.f32.mrb[0].mxu0
      %v638 = vadd.f32 %v537, %v637
      %v639 = vpop.f32.mrb[0].mxu0
      %v640 = vpop.f32.mrb[0].mxu0
      %v641 = vadd.f32 %v537, %v640
      %v642 = vpop.f32.mrb[0].mxu0
      %643 = vmatprep.mubr.bf16.mxu0 0
      %644 = vmatmul.mubr.bf16.gmra.mrb[0].mxu0 %v422
      %v645 = vpop.f32.mrb[0].mxu0
      %v646 = vadd.f32 %v537, %v645
      %v647 = vpop.f32.mrb[0].mxu0
      %v648 = vpop.f32.mrb[0].mxu0
      %v649 = vadd.f32 %v537, %v648
      %v650 = vpop.f32.mrb[0].mxu0
      %651 = vmatprep.mubr.bf16.mxu0 0
      %652 = vmatmul.mubr.bf16.gmra.mrb[0].mxu0 %v425
      %v653 = vpop.f32.mrb[0].mxu0
      %v654 = vadd.f32 %v537, %v653
      %v655 = vpop.f32.mrb[0].mxu0
      %v656 = vpop.f32.mrb[0].mxu0
      %v657 = vadd.f32 %v537, %v656
      %v658 = vpop.f32.mrb[0].mxu0
      %659 = vdwg.mxu0
      %v660 = vand.u32 2147483647, %v598
      %v661 = vand.u32 2147483647, %v601
      %v662 = vand.u32 2147483647, %v606
      %v663 = vand.u32 2147483647, %v609
      %v664 = vand.u32 2147483647, %v614
      %v665 = vand.u32 2147483647, %v617
      %v666 = vand.u32 2147483647, %v622
      %v667 = vand.u32 2147483647, %v625
      %v668 = vand.u32 2147483647, %v630
      %v669 = vand.u32 2147483647, %v633
      %v670 = vand.u32 2147483647, %v638
      %v671 = vand.u32 2147483647, %v641
      %v672 = vand.u32 2147483647, %v646
      %v673 = vand.u32 2147483647, %v649
      %v674 = vand.u32 2147483647, %v654
      %v675 = vand.u32 2147483647, %v657
      %v676 = vsub.f32 0.0, %v660
      %v677 = vsub.f32 0.0, %v661
      %v678 = vsub.f32 0.0, %v662
      %v679 = vsub.f32 0.0, %v663
      %v680 = vsub.f32 0.0, %v664
      %v681 = vsub.f32 0.0, %v665
      %v682 = vsub.f32 0.0, %v666
      %v683 = vsub.f32 0.0, %v667
      %v684 = vsub.f32 0.0, %v668
      %v685 = vsub.f32 0.0, %v669
      %v686 = vsub.f32 0.0, %v670
      %v687 = vsub.f32 0.0, %v671
      %v688 = vsub.f32 0.0, %v672
      %v689 = vsub.f32 0.0, %v673
      %v690 = vsub.f32 0.0, %v674
      %v691 = vsub.f32 0.0, %v675
      %v692 = vmul.f32 %v676, 1.442695
      %v693 = vpow.pop %v692
      %v694 = vmul.f32 %v677, 1.442695
      %v695 = vpow.pop %v694
      %v696 = vmul.f32 %v678, 1.442695
      %v697 = vpow.pop %v696
      %v698 = vmul.f32 %v679, 1.442695
      %v699 = vpow.pop %v698
      %v700 = vmul.f32 %v680, 1.442695
      %v701 = vpow.pop %v700
      %v702 = vmul.f32 %v681, 1.442695
      %v703 = vpow.pop %v702
      %v704 = vmul.f32 %v682, 1.442695
      %v705 = vpow.pop %v704
      %v706 = vmul.f32 %v683, 1.442695
      %v707 = vpow.pop %v706
      %v708 = vmul.f32 %v684, 1.442695
      %v709 = vpow.pop %v708
      %v710 = vmul.f32 %v685, 1.442695
      %v711 = vpow.pop %v710
      %v712 = vmul.f32 %v686, 1.442695
      %v713 = vpow.pop %v712
      %v714 = vmul.f32 %v687, 1.442695
      %v715 = vpow.pop %v714
      %v716 = vmul.f32 %v688, 1.442695
      %v717 = vpow.pop %v716
      %v718 = vmul.f32 %v689, 1.442695
      %v719 = vpow.pop %v718
      %v720 = vmul.f32 %v690, 1.442695
      %v721 = vpow.pop %v720
      %v722 = vmul.f32 %v691, 1.442695
      %v723 = vpow.pop %v722
      %v724 = vadd.f32 %v693, 1.0
      %v725 = vadd.f32 %v695, 1.0
      %v726 = vadd.f32 %v697, 1.0
      %v727 = vadd.f32 %v699, 1.0
      %v728 = vadd.f32 %v701, 1.0
      %v729 = vadd.f32 %v703, 1.0
      %v730 = vadd.f32 %v705, 1.0
      %v731 = vadd.f32 %v707, 1.0
      %v732 = vadd.f32 %v709, 1.0
      %v733 = vadd.f32 %v711, 1.0
      %v734 = vadd.f32 %v713, 1.0
      %v735 = vadd.f32 %v715, 1.0
      %v736 = vadd.f32 %v717, 1.0
      %v737 = vadd.f32 %v719, 1.0
      %v738 = vadd.f32 %v721, 1.0
      %v739 = vadd.f32 %v723, 1.0
      %v740 = vrcp.pop %v724
      %v741 = vmul.f32 1.0, %v740
      %v742 = vrcp.pop %v725
      %v743 = vmul.f32 1.0, %v742
      %v744 = vrcp.pop %v726
      %v745 = vmul.f32 1.0, %v744
      %v746 = vrcp.pop %v727
      %v747 = vmul.f32 1.0, %v746
      %v748 = vrcp.pop %v728
      %v749 = vmul.f32 1.0, %v748
      %v750 = vrcp.pop %v729
      %v751 = vmul.f32 1.0, %v750
      %v752 = vrcp.pop %v730
      %v753 = vmul.f32 1.0, %v752
      %v754 = vrcp.pop %v731
      %v755 = vmul.f32 1.0, %v754
      %v756 = vrcp.pop %v732
      %v757 = vmul.f32 1.0, %v756
      %v758 = vrcp.pop %v733
      %v759 = vmul.f32 1.0, %v758
      %v760 = vrcp.pop %v734
      %v761 = vmul.f32 1.0, %v760
      %v762 = vrcp.pop %v735
      %v763 = vmul.f32 1.0, %v762
      %v764 = vrcp.pop %v736
      %v765 = vmul.f32 1.0, %v764
      %v766 = vrcp.pop %v737
      %v767 = vmul.f32 1.0, %v766
      %v768 = vrcp.pop %v738
      %v769 = vmul.f32 1.0, %v768
      %v770 = vrcp.pop %v739
      %v771 = vmul.f32 1.0, %v770
      %vm772 = vcmp.ge.f32.partialorder %v598, 0.0
      %vm773 = vcmp.ge.f32.partialorder %v601, 0.0
      %vm774 = vcmp.ge.f32.partialorder %v606, 0.0
      %vm775 = vcmp.ge.f32.partialorder %v609, 0.0
      %vm776 = vcmp.ge.f32.partialorder %v614, 0.0
      %vm777 = vcmp.ge.f32.partialorder %v617, 0.0
      %vm778 = vcmp.ge.f32.partialorder %v622, 0.0
      %vm779 = vcmp.ge.f32.partialorder %v625, 0.0
      %vm780 = vcmp.ge.f32.partialorder %v630, 0.0
      %vm781 = vcmp.ge.f32.partialorder %v633, 0.0
      %vm782 = vcmp.ge.f32.partialorder %v638, 0.0
      %vm783 = vcmp.ge.f32.partialorder %v641, 0.0
      %vm784 = vcmp.ge.f32.partialorder %v646, 0.0
      %vm785 = vcmp.ge.f32.partialorder %v649, 0.0
      %vm786 = vcmp.ge.f32.partialorder %v654, 0.0
      %vm787 = vcmp.ge.f32.partialorder %v657, 0.0
      %v788 = vmul.f32 %v693, %v741
      %v789 = vmul.f32 %v695, %v743
      %v790 = vmul.f32 %v697, %v745
      %v791 = vmul.f32 %v699, %v747
      %v792 = vmul.f32 %v701, %v749
      %v793 = vmul.f32 %v703, %v751
      %v794 = vmul.f32 %v705, %v753
      %v795 = vmul.f32 %v707, %v755
      %v796 = vmul.f32 %v709, %v757
      %v797 = vmul.f32 %v711, %v759
      %v798 = vmul.f32 %v713, %v761
      %v799 = vmul.f32 %v715, %v763
      %v800 = vmul.f32 %v717, %v765
      %v801 = vmul.f32 %v719, %v767
      %v802 = vmul.f32 %v721, %v769
      %v803 = vmul.f32 %v723, %v771
      %v804 = vsel %vm772, %v741, %v788
      %v805 = vsel %vm773, %v743, %v789
      %v806 = vsel %vm774, %v745, %v790
      %v807 = vsel %vm775, %v747, %v791
      %v808 = vsel %vm776, %v749, %v792
      %v809 = vsel %vm777, %v751, %v793
      %v810 = vsel %vm778, %v753, %v794
      %v811 = vsel %vm779, %v755, %v795
      %v812 = vsel %vm780, %v757, %v796
      %v813 = vsel %vm781, %v759, %v797
      %v814 = vsel %vm782, %v761, %v798
      %v815 = vsel %vm783, %v763, %v799
      %v816 = vsel %vm784, %v765, %v800
      %v817 = vsel %vm785, %v767, %v801
      %v818 = vsel %vm786, %v769, %v802
      %v819 = vsel %vm787, %v771, %v803
      %v820 = vmul.f32 %v598, %v804
      %v821 = vmul.f32 %v601, %v805
      %v822 = vmul.f32 %v606, %v806
      %v823 = vmul.f32 %v609, %v807
      %v824 = vmul.f32 %v614, %v808
      %v825 = vmul.f32 %v617, %v809
      %v826 = vmul.f32 %v622, %v810
      %v827 = vmul.f32 %v625, %v811
      %v828 = vmul.f32 %v630, %v812
      %v829 = vmul.f32 %v633, %v813
      %v830 = vmul.f32 %v638, %v814
      %v831 = vmul.f32 %v641, %v815
      %v832 = vmul.f32 %v646, %v816
      %v833 = vmul.f32 %v649, %v817
      %v834 = vmul.f32 %v654, %v818
      %v835 = vmul.f32 %v657, %v819
      %836 = vst [vmem:[%s294] sm:$0xff] %v462
      %837 = vst [vmem:[%s294 + $0x8] sm:$0xff] %v465
      %838 = vst [vmem:[%s294 + $0x10] sm:$0xff] %v470
      %839 = vst [vmem:[%s294 + $0x18] sm:$0xff] %v473
      %840 = vst [vmem:[%s294 + $0x20] sm:$0xff] %v478
      %841 = vst [vmem:[%s294 + $0x28] sm:$0xff] %v481
      %842 = vst [vmem:[%s294 + $0x30] sm:$0xff] %v486
      %843 = vst [vmem:[%s294 + $0x38] sm:$0xff] %v489
      %844 = vst [vmem:[%s294 + $0x40] sm:$0xff] %v494
      %845 = vst [vmem:[%s294 + $0x48] sm:$0xff] %v497
      %846 = vst [vmem:[%s294 + $0x50] sm:$0xff] %v502
      %847 = vst [vmem:[%s294 + $0x58] sm:$0xff] %v505
      %848 = vst [vmem:[%s294 + $0x60] sm:$0xff] %v510
      %849 = vst [vmem:[%s294 + $0x68] sm:$0xff] %v513
      %850 = vst [vmem:[%s294 + $0x70] sm:$0xff] %v518
      %851 = vst [vmem:[%s294 + $0x78] sm:$0xff] %v521
      %852 = vst [vmem:[%s300] sm:$0xff] %v820
      %853 = vst [vmem:[%s300 + $0x8] sm:$0xff] %v821
      %854 = vst [vmem:[%s300 + $0x10] sm:$0xff] %v822
      %855 = vst [vmem:[%s300 + $0x18] sm:$0xff] %v823
      %856 = vst [vmem:[%s300 + $0x20] sm:$0xff] %v824
      %857 = vst [vmem:[%s300 + $0x28] sm:$0xff] %v825
      %858 = vst [vmem:[%s300 + $0x30] sm:$0xff] %v826
      %859 = vst [vmem:[%s300 + $0x38] sm:$0xff] %v827
      %860 = vst [vmem:[%s300 + $0x40] sm:$0xff] %v828
      %861 = vst [vmem:[%s300 + $0x48] sm:$0xff] %v829
      %862 = vst [vmem:[%s300 + $0x50] sm:$0xff] %v830
      %863 = vst [vmem:[%s300 + $0x58] sm:$0xff] %v831
      %864 = vst [vmem:[%s300 + $0x60] sm:$0xff] %v832
      %865 = vst [vmem:[%s300 + $0x68] sm:$0xff] %v833
      %866 = vst [vmem:[%s300 + $0x70] sm:$0xff] %v834
      %867 = vst [vmem:[%s300 + $0x78] sm:$0xff] %v835
      %v868 = vadd.f32 %v462, %v465
      %v869 = vadd.f32 %v868, %v470
      %v870 = vadd.f32 %v869, %v473
      %v871 = vadd.f32 %v870, %v478
      %v872 = vadd.f32 %v871, %v481
      %v873 = vadd.f32 %v872, %v486
      %v874 = vadd.f32 %v873, %v489
      %v875 = vadd.f32 %v874, %v494
      %v876 = vadd.f32 %v875, %v497
      %v877 = vadd.f32 %v876, %v502
      %v878 = vadd.f32 %v877, %v505
      %v879 = vadd.f32 %v878, %v510
      %v880 = vadd.f32 %v879, %v513
      %v881 = vadd.f32 %v880, %v518
      %v882 = vadd.f32 %v881, %v521
      %v883 = vrot.slane %v882, 4
      %v884 = vadd.f32 %v882, %v883
      %v885 = vrot.slane %v884, 2
      %v886 = vadd.f32 %v884, %v885
      %v887 = vrot.slane %v886, 1
      %v888 = vadd.f32 %v886, %v887
      %v889 = vmul.f32 %v462, %v462
      %v890 = vmul.f32 %v465, %v465
      %v891 = vmul.f32 %v470, %v470
      %v892 = vmul.f32 %v473, %v473
      %v893 = vmul.f32 %v478, %v478
      %v894 = vmul.f32 %v481, %v481
      %v895 = vmul.f32 %v486, %v486
      %v896 = vmul.f32 %v489, %v489
      %v897 = vmul.f32 %v494, %v494
      %v898 = vmul.f32 %v497, %v497
      %v899 = vmul.f32 %v502, %v502
      %v900 = vmul.f32 %v505, %v505
      %v901 = vmul.f32 %v510, %v510
      %v902 = vmul.f32 %v513, %v513
      %v903 = vmul.f32 %v518, %v518
      %v904 = vmul.f32 %v521, %v521
      %v905 = vadd.f32 %v889, %v890
      %v906 = vadd.f32 %v905, %v891
      %v907 = vadd.f32 %v906, %v892
      %v908 = vadd.f32 %v907, %v893
      %v909 = vadd.f32 %v908, %v894
      %v910 = vadd.f32 %v909, %v895
      %v911 = vadd.f32 %v910, %v896
      %v912 = vadd.f32 %v911, %v897
      %v913 = vadd.f32 %v912, %v898
      %v914 = vadd.f32 %v913, %v899
      %v915 = vadd.f32 %v914, %v900
      %v916 = vadd.f32 %v915, %v901
      %v917 = vadd.f32 %v916, %v902
      %v918 = vadd.f32 %v917, %v903
      %v919 = vadd.f32 %v918, %v904
      %v920 = vrot.slane %v919, 4
      %v921 = vadd.f32 %v919, %v920
      %v922 = vrot.slane %v921, 2
      %v923 = vadd.f32 %v921, %v922
      %v924 = vrot.slane %v923, 1
      %v925 = vadd.f32 %v923, %v924
      %v926 = vadd.f32 %v820, %v821
      %v927 = vadd.f32 %v926, %v822
      %v928 = vadd.f32 %v927, %v823
      %v929 = vadd.f32 %v928, %v824
      %v930 = vadd.f32 %v929, %v825
      %v931 = vadd.f32 %v930, %v826
      %v932 = vadd.f32 %v931, %v827
      %v933 = vadd.f32 %v932, %v828
      %v934 = vadd.f32 %v933, %v829
      %v935 = vadd.f32 %v934, %v830
      %v936 = vadd.f32 %v935, %v831
      %v937 = vadd.f32 %v936, %v832
      %v938 = vadd.f32 %v937, %v833
      %v939 = vadd.f32 %v938, %v834
      %v940 = vadd.f32 %v939, %v835
      %v941 = vrot.slane %v940, 4
      %v942 = vadd.f32 %v940, %v941
      %v943 = vrot.slane %v942, 2
      %v944 = vadd.f32 %v942, %v943
      %v945 = vrot.slane %v944, 1
      %v946 = vadd.f32 %v944, %v945
      %v947 = vmul.f32 %v820, %v820
      %v948 = vmul.f32 %v821, %v821
      %v949 = vmul.f32 %v822, %v822
      %v950 = vmul.f32 %v823, %v823
      %v951 = vmul.f32 %v824, %v824
      %v952 = vmul.f32 %v825, %v825
      %v953 = vmul.f32 %v826, %v826
      %v954 = vmul.f32 %v827, %v827
      %v955 = vmul.f32 %v828, %v828
      %v956 = vmul.f32 %v829, %v829
      %v957 = vmul.f32 %v830, %v830
      %v958 = vmul.f32 %v831, %v831
      %v959 = vmul.f32 %v832, %v832
      %v960 = vmul.f32 %v833, %v833
      %v961 = vmul.f32 %v834, %v834
      %v962 = vmul.f32 %v835, %v835
      %v963 = vadd.f32 %v947, %v948
      %v964 = vadd.f32 %v963, %v949
      %v965 = vadd.f32 %v964, %v950
      %v966 = vadd.f32 %v965, %v951
      %v967 = vadd.f32 %v966, %v952
      %v968 = vadd.f32 %v967, %v953
      %v969 = vadd.f32 %v968, %v954
      %v970 = vadd.f32 %v969, %v955
      %v971 = vadd.f32 %v970, %v956
      %v972 = vadd.f32 %v971, %v957
      %v973 = vadd.f32 %v972, %v958
      %v974 = vadd.f32 %v973, %v959
      %v975 = vadd.f32 %v974, %v960
      %v976 = vadd.f32 %v975, %v961
      %v977 = vadd.f32 %v976, %v962
      %v978 = vrot.slane %v977, 4
      %v979 = vadd.f32 %v977, %v978
      %v980 = vrot.slane %v979, 2
      %v981 = vadd.f32 %v979, %v980
      %v982 = vrot.slane %v981, 1
      %v983 = vadd.f32 %v981, %v982
      %vm984 = vcmask 1040384
      %v985 = vsel %vm984, %v888, %v925
      %vm986 = vcmask 1041408
      %v987 = vsel %vm986, %v985, %v946
      %vm988 = vcmask 1042432
      %v989 = vsel %vm988, %v987, %v983
      %vm990 = vcmask 1043456
      %v991 = vsel %vm990, %v989, 0.0
      %vm992 = vcmask 1044480
      %v993 = vsel %vm992, %v991, 0.0
      %vm994 = vcmask 1045504
      %v995 = vsel %vm994, %v993, 0.0
      %vm996 = vcmask 1046528
      %v997 = vsel %vm996, %v995, 0.0
      %998 = vst [vmem:[%s305] sm:$0xff] %v997
      %s999 = smul.u32 16, %s19
      %p1000 = scmp.lt.s32.totalorder %s999, 31
      %s1001 = scalar_select %p1000, %s999, 31
      %s1002 = smul.addr %s1001, 8
      %s1003 = scalar_lea.vmem %s5, %s1002
      %s1004 = smul.u32 16, %s19
      %p1005 = scmp.lt.s32.totalorder %s1004, 31
      %s1006 = scalar_select %p1005, %s1004, 31
      %s1007 = smul.addr %s1006, 8
      %s1008 = scalar_lea.vmem %s6, %s1007
      %p1009 = scmp.lt.s32.totalorder %s19, 1
      %s1010 = scalar_select %p1009, %s19, 1
      %s1011 = smul.addr %s1010, 8
      %s1012 = scalar_lea.vmem %s7, %s1011
      // Predicated region
      $region41: #{residual_block.3} parent=39 // pred_check
        %p1013 = pneg %p147
      $region42: #{residual_block.3} parent=39 // pred_check_branch
        %1015 = sbr.rel (%p1013) target = $region44
      $region43: #{residual_block.3} parent=39 // pred_region
        %s1016 = smul.u32 16, %s19
      $region44: #{residual_block.3} parent=39 // pred_fallthru
        _
      // Predicated region
      $region45: #{residual_block.3} parent=39 // pred_check
        %p1017 = pneg %p173
      $region46: #{residual_block.3} parent=39 // pred_check_branch
        %1019 = sbr.rel (%p1017) target = $region48
      $region47: #{residual_block.3} parent=39 // pred_region
        %s1020 = smul.u32 16, %s19
      $region48: #{residual_block.3} parent=39 // pred_fallthru
        _
      // Predicated region
      $region49: #{residual_block.3} parent=39 // pred_check
        %p1021 = pneg %p199
      $region50: #{residual_block.3} parent=39 // pred_check_branch
        %1023 = sbr.rel (%p1021) target = $region52
      $region51: #{residual_block.3} parent=39 // pred_region
        _
      $region52: #{residual_block.3} parent=39 // pred_fallthru
        _
    $region40: #{residual_block.3} parent=5 // pred_fallthru
      _
    %p1024 = scmp.le.s32.totalorder 2, %s14
    // Predicated region
    $region53: #{residual_block.3} parent=5 // pred_check
      %p1025 = pneg %p1024
    $region54: #{residual_block.3} parent=5 // pred_check_branch
      %1027 = sbr.rel (%p1025) target = $region56
    $region55: #{residual_block.3} parent=5 // pred_region
      %s1028 = ssub.s32 %s14, 2
      // Predicated region
      $region57: #{residual_block.3} parent=55 // pred_check
        %p1029 = pneg %p153
      $region58: #{residual_block.3} parent=55 // pred_check_branch
        %1031 = sbr.rel (%p1029) target = $region60
      $region59: #{residual_block.3} parent=55 // pred_region
        %s1032 = smul.u32 16, %s20
        %p1033 = scmp.lt.s32.totalorder %s1032, 31
        %s1034 = scalar_select %p1033, %s1032, 31
        %s1035 = smul.addr %s1034, 8
        %s1036 = scalar_lea.vmem %s5, %s1035
      $region60: #{residual_block.3} parent=55 // pred_fallthru
        _
      // Predicated region
      $region61: #{residual_block.3} parent=55 // pred_check
        %p1037 = pneg %p179
      $region62: #{residual_block.3} parent=55 // pred_check_branch
        %1039 = sbr.rel (%p1037) target = $region64
      $region63: #{residual_block.3} parent=55 // pred_region
        %s1040 = smul.u32 16, %s20
        %p1041 = scmp.lt.s32.totalorder %s1040, 31
        %s1042 = scalar_select %p1041, %s1040, 31
        %s1043 = smul.addr %s1042, 8
        %s1044 = scalar_lea.vmem %s6, %s1043
      $region64: #{residual_block.3} parent=55 // pred_fallthru
        _
      // Predicated region
      $region65: #{residual_block.3} parent=55 // pred_check
        %p1045 = pneg %p205
      $region66: #{residual_block.3} parent=55 // pred_check_branch
        %1047 = sbr.rel (%p1045) target = $region68
      $region67: #{residual_block.3} parent=55 // pred_region
        %p1048 = scmp.lt.s32.totalorder %s20, 1
        %s1049 = scalar_select %p1048, %s20, 1
        %s1050 = smul.addr %s1049, 8
        %s1051 = scalar_lea.vmem %s7, %s1050
      $region68: #{residual_block.3} parent=55 // pred_fallthru
        _
    $region56: #{residual_block.3} parent=5 // pred_fallthru
      _
  $region6: #{residual_block.3} parent=0 // loop_footer
    %s18 = sadd.s32 1, %s14
  $region7: #{residual_block.3} parent=0 // loop_footer_branch
    %13 = sbr.rel target = $region3
  $region8: #{residual_block.3} parent=0 // loop_exit
    _

// kernel: residual_block.4
$region0: #{residual_block.4}
  #allocation0 [shape = 'u32[]', space=smem, size = 0x4, offset = 0x4, fixed_abs, tag = 'smem constant byte address 0x4 - core index']
  #allocation1 [shape = 'u32[144,128]{1,0:T(1,128)}', space=vmem, size = 0x12000, scoped, tag = 'internal scratch']
  %s0 = inlined_call_operand.vmem [shape: f32[256,128], index: 0, kind: input, shape index: {}]
  %s1 = inlined_call_operand.vmem [shape: f32[256,128], index: 1, kind: input, shape index: {}]
  %s2 = inlined_call_operand.vmem [shape: f32[1,128], index: 2, kind: input, shape index: {}]
  %s3 = inlined_call_operand.vmem [shape: f32[1,128], index: 3, kind: input, shape index: {}]
  %s4 = inlined_call_operand.vmem [shape: f32[1,128], index: 4, kind: input, shape index: {}]
  %s5 = inlined_call_operand.vmem [shape: f32[1,128], index: 5, kind: input, shape index: {}]
  %s6 = inlined_call_operand.vmem [shape: bf16[128,128], index: 6, kind: input, shape index: {}]
  %s7 = inlined_call_operand.vmem [shape: f32[1,128], index: 7, kind: input, shape index: {}]
  %s8 = inlined_call_operand.vmem [shape: f32[256,128], index: 8, kind: output, shape index: {0}]
  %s9 = inlined_call_operand.vmem [shape: f32[16,128], index: 9, kind: output, shape index: {1}]
  %10 = xla_tuple %s8, %s9
  %s11 = sld [smem:[#allocation0]]
  $region73: #{residual_block.4} parent=0
    _
  %s13 = ssub.s32 1, %s11
  %s14 = scalar_select 0, %s13, %s11
  loop: start=0, step=1, limit=4
  $region2: #{residual_block.4} parent=0 // loop_pre_header
    _
  $region3: #{residual_block.4} parent=0 // loop_header
    %s16 = sphi 0, %s20
    %p17 = scmp.ge.s32.totalorder %s16, 4
    %s26 = sphi 0, %s28
    %s29 = sphi 0, %s26
    %s30 = sphi 0, %s29
    %s46 = sphi 0, %s30
    %s52 = sphi 0, %s54
    %s55 = sphi 0, %s52
    %s56 = sphi 0, %s55
    %s72 = sphi 0, %s56
    %s76 = sphi 0, %s76
    %s78 = sphi 0, %s76
    %s79 = sphi 0, %s78
    %s93 = sphi 0, %s79
    %s97 = sphi 0, %s97
    %s99 = sphi 0, %s97
    %s100 = sphi 0, %s99
    %s114 = sphi 0, %s100
    %s118 = sphi 0, %s118
    %s120 = sphi 0, %s118
    %s121 = sphi 0, %s120
    %s135 = sphi 0, %s121
    %s139 = sphi 0, %s139
    %s141 = sphi 0, %s139
    %s142 = sphi 0, %s141
    %s156 = sphi 0, %s142
    %s160 = sphi 0, %s160
    %s162 = sphi 0, %s160
    %s163 = sphi 0, %s162
    %s177 = sphi 0, %s163
    %s181 = sphi 0, %s181
    %s183 = sphi 0, %s181
    %s184 = sphi 0, %s183
    %s198 = sphi 0, %s184
    %s204 = sphi 0, %s206
    %s207 = sphi 0, %s204
    %s208 = sphi 0, %s207
    %s224 = sphi 0, %s208
    %s230 = sphi 0, %s232
    %s233 = sphi 0, %s230
    %s234 = sphi 0, %s233
    %s250 = sphi 0, %s234
  $region4: #{residual_block.4} parent=0 // loop_header_branch
    %19 = sbr.rel (%p17) target = $region8
  $region5: #{residual_block.4} parent=0 // loop_body
    %s21 = ssub.s32 %s16, 1
    %s22 = ssub.s32 %s16, 2
    %s23 = sadd.s32 %s16, 1
    %s24 = ssub.s32 %s16, %s23
    %p25 = scmp.eq.s32.totalorder %s24, 0
    %s27 = sadd.s32 %s26, 1
    %s28 = scalar_select %p25, %s26, %s27
    %p31 = pneg %p25
    %p32 = scmp.eq.s32.totalorder %s16, 1
    %p33 = por %p31, %p32
    %p34 = scmp.ne.s32.totalorder %s26, %s29
    %p35 = scmp.eq.s32.totalorder %s16, 0
    %p36 = por %p34, %p35
    %p37 = scmp.ne.s32.totalorder %s26, %s29
    %p38 = scmp.eq.s32.totalorder %s21, 1
    %p39 = por %p37, %p38
    %p40 = scmp.ne.s32.totalorder %s29, %s30
    %p41 = scmp.eq.s32.totalorder %s21, 0
    %p42 = por %p40, %p41
    %p43 = scmp.ne.s32.totalorder %s29, %s30
    %p44 = scmp.eq.s32.totalorder %s22, 1
    %p45 = por %p43, %p44
    %p47 = scmp.ne.s32.totalorder %s30, %s46
    %p48 = scmp.eq.s32.totalorder %s22, 0
    %p49 = por %p47, %p48
    %s50 = ssub.s32 %s16, %s23
    %p51 = scmp.eq.s32.totalorder %s50, 0
    %s53 = sadd.s32 %s52, 1
    %s54 = scalar_select %p51, %s52, %s53
    %p57 = pneg %p51
    %p58 = scmp.eq.s32.totalorder %s16, 1
    %p59 = por %p57, %p58
    %p60 = scmp.ne.s32.totalorder %s52, %s55
    %p61 = scmp.eq.s32.totalorder %s16, 0
    %p62 = por %p60, %p61
    %p63 = scmp.ne.s32.totalorder %s52, %s55
    %p64 = scmp.eq.s32.totalorder %s21, 1
    %p65 = por %p63, %p64
    %p66 = scmp.ne.s32.totalorder %s55, %s56
    %p67 = scmp.eq.s32.totalorder %s21, 0
    %p68 = por %p66, %p67
    %p69 = scmp.ne.s32.totalorder %s55, %s56
    %p70 = scmp.eq.s32.totalorder %s22, 1
    %p71 = por %p69, %p70
    %p73 = scmp.ne.s32.totalorder %s56, %s72
    %p74 = scmp.eq.s32.totalorder %s22, 0
    %p75 = por %p73, %p74
    %s77 = sadd.s32 %s76, 1
    %p80 = scmp.eq.s32.totalorder %s16, 1
    %p81 = scmp.ne.s32.totalorder %s76, %s78
    %p82 = scmp.eq.s32.totalorder %s16, 0
    %p83 = por %p81, %p82
    %p84 = scmp.ne.s32.totalorder %s76, %s78
    %p85 = scmp.eq.s32.totalorder %s21, 1
    %p86 = por %p84, %p85
    %p87 = scmp.ne.s32.totalorder %s78, %s79
    %p88 = scmp.eq.s32.totalorder %s21, 0
    %p89 = por %p87, %p88
    %p90 = scmp.ne.s32.totalorder %s78, %s79
    %p91 = scmp.eq.s32.totalorder %s22, 1
    %p92 = por %p90, %p91
    %p94 = scmp.ne.s32.totalorder %s79, %s93
    %p95 = scmp.eq.s32.totalorder %s22, 0
    %p96 = por %p94, %p95
    %s98 = sadd.s32 %s97, 1
    %p101 = scmp.eq.s32.totalorder %s16, 1
    %p102 = scmp.ne.s32.totalorder %s97, %s99
    %p103 = scmp.eq.s32.totalorder %s16, 0
    %p104 = por %p102, %p103
    %p105 = scmp.ne.s32.totalorder %s97, %s99
    %p106 = scmp.eq.s32.totalorder %s21, 1
    %p107 = por %p105, %p106
    %p108 = scmp.ne.s32.totalorder %s99, %s100
    %p109 = scmp.eq.s32.totalorder %s21, 0
    %p110 = por %p108, %p109
    %p111 = scmp.ne.s32.totalorder %s99, %s100
    %p112 = scmp.eq.s32.totalorder %s22, 1
    %p113 = por %p111, %p112
    %p115 = scmp.ne.s32.totalorder %s100, %s114
    %p116 = scmp.eq.s32.totalorder %s22, 0
    %p117 = por %p115, %p116
    %s119 = sadd.s32 %s118, 1
    %p122 = scmp.eq.s32.totalorder %s16, 1
    %p123 = scmp.ne.s32.totalorder %s118, %s120
    %p124 = scmp.eq.s32.totalorder %s16, 0
    %p125 = por %p123, %p124
    %p126 = scmp.ne.s32.totalorder %s118, %s120
    %p127 = scmp.eq.s32.totalorder %s21, 1
    %p128 = por %p126, %p127
    %p129 = scmp.ne.s32.totalorder %s120, %s121
    %p130 = scmp.eq.s32.totalorder %s21, 0
    %p131 = por %p129, %p130
    %p132 = scmp.ne.s32.totalorder %s120, %s121
    %p133 = scmp.eq.s32.totalorder %s22, 1
    %p134 = por %p132, %p133
    %p136 = scmp.ne.s32.totalorder %s121, %s135
    %p137 = scmp.eq.s32.totalorder %s22, 0
    %p138 = por %p136, %p137
    %s140 = sadd.s32 %s139, 1
    %p143 = scmp.eq.s32.totalorder %s16, 1
    %p144 = scmp.ne.s32.totalorder %s139, %s141
    %p145 = scmp.eq.s32.totalorder %s16, 0
    %p146 = por %p144, %p145
    %p147 = scmp.ne.s32.totalorder %s139, %s141
    %p148 = scmp.eq.s32.totalorder %s21, 1
    %p149 = por %p147, %p148
    %p150 = scmp.ne.s32.totalorder %s141, %s142
    %p151 = scmp.eq.s32.totalorder %s21, 0
    %p152 = por %p150, %p151
    %p153 = scmp.ne.s32.totalorder %s141, %s142
    %p154 = scmp.eq.s32.totalorder %s22, 1
    %p155 = por %p153, %p154
    %p157 = scmp.ne.s32.totalorder %s142, %s156
    %p158 = scmp.eq.s32.totalorder %s22, 0
    %p159 = por %p157, %p158
    %s161 = sadd.s32 %s160, 1
    %p164 = scmp.eq.s32.totalorder %s16, 1
    %p165 = scmp.ne.s32.totalorder %s160, %s162
    %p166 = scmp.eq.s32.totalorder %s16, 0
    %p167 = por %p165, %p166
    %p168 = scmp.ne.s32.totalorder %s160, %s162
    %p169 = scmp.eq.s32.totalorder %s21, 1
    %p170 = por %p168, %p169
    %p171 = scmp.ne.s32.totalorder %s162, %s163
    %p172 = scmp.eq.s32.totalorder %s21, 0
    %p173 = por %p171, %p172
    %p174 = scmp.ne.s32.totalorder %s162, %s163
    %p175 = scmp.eq.s32.totalorder %s22, 1
    %p176 = por %p174, %p175
    %p178 = scmp.ne.s32.totalorder %s163, %s177
    %p179 = scmp.eq.s32.totalorder %s22, 0
    %p180 = por %p178, %p179
    %s182 = sadd.s32 %s181, 1
    %p185 = scmp.eq.s32.totalorder %s16, 1
    %p186 = scmp.ne.s32.totalorder %s181, %s183
    %p187 = scmp.eq.s32.totalorder %s16, 0
    %p188 = por %p186, %p187
    %p189 = scmp.ne.s32.totalorder %s181, %s183
    %p190 = scmp.eq.s32.totalorder %s21, 1
    %p191 = por %p189, %p190
    %p192 = scmp.ne.s32.totalorder %s183, %s184
    %p193 = scmp.eq.s32.totalorder %s21, 0
    %p194 = por %p192, %p193
    %p195 = scmp.ne.s32.totalorder %s183, %s184
    %p196 = scmp.eq.s32.totalorder %s22, 1
    %p197 = por %p195, %p196
    %p199 = scmp.ne.s32.totalorder %s184, %s198
    %p200 = scmp.eq.s32.totalorder %s22, 0
    %p201 = por %p199, %p200
    %s202 = ssub.s32 %s16, %s23
    %p203 = scmp.eq.s32.totalorder %s202, 0
    %s205 = sadd.s32 %s204, 1
    %s206 = scalar_select %p203, %s204, %s205
    %p209 = pneg %p203
    %p210 = scmp.eq.s32.totalorder %s16, 1
    %p211 = por %p209, %p210
    %p212 = scmp.ne.s32.totalorder %s204, %s207
    %p213 = scmp.eq.s32.totalorder %s16, 0
    %p214 = por %p212, %p213
    %p215 = scmp.ne.s32.totalorder %s204, %s207
    %p216 = scmp.eq.s32.totalorder %s21, 1
    %p217 = por %p215, %p216
    %p218 = scmp.ne.s32.totalorder %s207, %s208
    %p219 = scmp.eq.s32.totalorder %s21, 0
    %p220 = por %p218, %p219
    %p221 = scmp.ne.s32.totalorder %s207, %s208
    %p222 = scmp.eq.s32.totalorder %s22, 1
    %p223 = por %p221, %p222
    %p225 = scmp.ne.s32.totalorder %s208, %s224
    %p226 = scmp.eq.s32.totalorder %s22, 0
    %p227 = por %p225, %p226
    %s228 = ssub.s32 %s16, %s23
    %p229 = scmp.eq.s32.totalorder %s228, 0
    %s231 = sadd.s32 %s230, 1
    %s232 = scalar_select %p229, %s230, %s231
    %p235 = pneg %p229
    %p236 = scmp.eq.s32.totalorder %s16, 1
    %p237 = por %p235, %p236
    %p238 = scmp.ne.s32.totalorder %s230, %s233
    %p239 = scmp.eq.s32.totalorder %s16, 0
    %p240 = por %p238, %p239
    %p241 = scmp.ne.s32.totalorder %s230, %s233
    %p242 = scmp.eq.s32.totalorder %s21, 1
    %p243 = por %p241, %p242
    %p244 = scmp.ne.s32.totalorder %s233, %s234
    %p245 = scmp.eq.s32.totalorder %s21, 0
    %p246 = por %p244, %p245
    %p247 = scmp.ne.s32.totalorder %s233, %s234
    %p248 = scmp.eq.s32.totalorder %s22, 1
    %p249 = por %p247, %p248
    %p251 = scmp.ne.s32.totalorder %s234, %s250
    %p252 = scmp.eq.s32.totalorder %s22, 0
    %p253 = por %p251, %p252
    %p254 = scmp.le.s32.totalorder 1, %s16
    %p255 = scmp.lt.s32.totalorder %s16, 3
    %p256 = pnand %p254, %p255
    %p257 = pneg %p256
    // Predicated region
    $region9: #{residual_block.4} parent=5 // pred_check
      _
    $region10: #{residual_block.4} parent=5 // pred_check_branch
      %259 = sbr.rel (%p256) target = $region12
    $region11: #{residual_block.4} parent=5 // pred_region
      %s260 = ssub.s32 %s16, 1
      // Predicated region
      $region13: #{residual_block.4} parent=11 // pred_check
        %p261 = pneg %p89
      $region14: #{residual_block.4} parent=11 // pred_check_branch
        %263 = sbr.rel (%p261) target = $region16
      $region15: #{residual_block.4} parent=11 // pred_region
        _
      $region16: #{residual_block.4} parent=11 // pred_fallthru
        _
      // Predicated region
      $region17: #{residual_block.4} parent=11 // pred_check
        %p264 = pneg %p110
      $region18: #{residual_block.4} parent=11 // pred_check_branch
        %266 = sbr.rel (%p264) target = $region20
      $region19: #{residual_block.4} parent=11 // pred_region
        _
      $region20: #{residual_block.4} parent=11 // pred_fallthru
        _
      // Predicated region
      $region21: #{residual_block.4} parent=11 // pred_check
        %p267 = pneg %p131
      $region22: #{residual_block.4} parent=11 // pred_check_branch
        %269 = sbr.rel (%p267) target = $region24
      $region23: #{residual_block.4} parent=11 // pred_region
        _
      $region24: #{residual_block.4} parent=11 // pred_fallthru
        _
      // Predicated region
      $region25: #{residual_block.4} parent=11 // pred_check
        %p270 = pneg %p152
      $region26: #{residual_block.4} parent=11 // pred_check_branch
        %272 = sbr.rel (%p270) target = $region28
      $region27: #{residual_block.4} parent=11 // pred_region
        _
      $region28: #{residual_block.4} parent=11 // pred_fallthru
        _
      // Predicated region
      $region29: #{residual_block.4} parent=11 // pred_check
        %p273 = pneg %p173
      $region30: #{residual_block.4} parent=11 // pred_check_branch
        %275 = sbr.rel (%p273) target = $region32
      $region31: #{residual_block.4} parent=11 // pred_region
        _
      $region32: #{residual_block.4} parent=11 // pred_fallthru
        _
      // Predicated region
      $region33: #{residual_block.4} parent=11 // pred_check
        %p276 = pneg %p194
      $region34: #{residual_block.4} parent=11 // pred_check_branch
        %278 = sbr.rel (%p276) target = $region36
      $region35: #{residual_block.4} parent=11 // pred_region
        _
      $region36: #{residual_block.4} parent=11 // pred_fallthru
        _
    $region12: #{residual_block.4} parent=5 // pred_fallthru
      _
    %p279 = scmp.lt.s32.totalorder %s16, 2
    // Predicated region
    $region37: #{residual_block.4} parent=5 // pred_check
      %p280 = pneg %p279
    $region38: #{residual_block.4} parent=5 // pred_check_branch
      %282 = sbr.rel (%p280) target = $region40
    $region39: #{residual_block.4} parent=5 // pred_region
      // Predicated region
      $region41: #{residual_block.4} parent=39 // pred_check
        %p283 = pneg %p36
      $region42: #{residual_block.4} parent=39 // pred_check_branch
        %285 = sbr.rel (%p283) target = $region44
      $region43: #{residual_block.4} parent=39 // pred_region
        %s286 = smul.u32 16, %s16
        %p287 = scmp.lt.s32.totalorder %s286, 31
        %s288 = scalar_select %p287, %s286, 31
        %s289 = smul.addr %s288, 8
        %s290 = scalar_lea.vmem %s0, %s289
        %s291 = smul.u32 16, %s16
      $region44: #{residual_block.4} parent=39 // pred_fallthru
        _
      // Predicated region
      $region45: #{residual_block.4} parent=39 // pred_check
        %p292 = pneg %p62
      $region46: #{residual_block.4} parent=39 // pred_check_branch
        %294 = sbr.rel (%p292) target = $region48
      $region47: #{residual_block.4} parent=39 // pred_region
        %s295 = smul.u32 16, %s16
        %p296 = scmp.lt.s32.totalorder %s295, 31
        %s297 = scalar_select %p296, %s295, 31
        %s298 = smul.addr %s297, 8
        %s299 = scalar_lea.vmem %s1, %s298
        %s300 = smul.u32 16, %s16
      $region48: #{residual_block.4} parent=39 // pred_fallthru
        _
    $region40: #{residual_block.4} parent=5 // pred_fallthru
      _
    %p301 = scmp.le.s32.totalorder 1, %s16
    %p302 = scmp.lt.s32.totalorder %s16, 3
    %p303 = pnand %p301, %p302
    %p304 = pneg %p303
    // Predicated region
    $region49: #{residual_block.4} parent=5 // pred_check
      _
    $region50: #{residual_block.4} parent=5 // pred_check_branch
      %306 = sbr.rel (%p303) target = $region52
    $region51: #{residual_block.4} parent=5 // pred_region
      %s307 = ssub.s32 %s16, 1
      %s308 = smul.u32 16, %s21
      %p309 = scmp.lt.s32.totalorder %s308, 31
      %s310 = scalar_select %p309, %s308, 31
      %s311 = smul.addr %s310, 8
      %s312 = scalar_lea.vmem %s0, %s311
      %p313 = pneg %p42
      %p314 = pneg %p39
      %s315 = smul.u32 16, %s21
      %p316 = scmp.lt.s32.totalorder %s315, 31
      %s317 = scalar_select %p316, %s315, 31
      %s318 = smul.addr %s317, 8
      %s319 = scalar_lea.vmem %s1, %s318
      %p320 = pneg %p68
      %p321 = pneg %p65
      %p322 = pneg %p89
      %p323 = pneg %p86
      %p324 = pneg %p110
      %p325 = pneg %p107
      %p326 = pneg %p131
      %p327 = pneg %p128
      %p328 = pneg %p152
      %p329 = pneg %p149
      %p330 = pneg %p173
      %p331 = pneg %p170
      %p332 = pneg %p194
      %p333 = pneg %p191
      %p334 = pneg %p220
      %p335 = pneg %p217
      %s336 = smul.u32 16, %s21
      %p337 = scmp.lt.s32.totalorder %s336, 31
      %s338 = scalar_select %p337, %s336, 31
      %s339 = smul.addr %s338, 8
      %s340 = scalar_lea.vmem %s8, %s339
      %p341 = pneg %p246
      %p342 = pneg %p243
      %p343 = scmp.lt.s32.totalorder %s21, 1
      %s344 = scalar_select %p343, %s21, 1
      %s345 = smul.addr %s344, 8
      %s346 = scalar_lea.vmem %s9, %s345
      %s347 = smul.u32 16, %s21
      %p348 = scmp.lt.s32.totalorder %s347, 31
      %s349 = scalar_select %p348, %s347, 31
      %s350 = smul.addr %s349, 8
      %s351 = scalar_lea.vmem %s0, %s350
      %s352 = smul.u32 16, %s21
      %s353 = smul.u32 16, %s21
      %p354 = scmp.lt.s32.totalorder %s353, 31
      %s355 = scalar_select %p354, %s353, 31
      %s356 = smul.addr %s355, 8
      %s357 = scalar_lea.vmem %s1, %s356
      %s358 = smul.u32 16, %s21
      %s359 = smul.u32 16, %s21
      %p360 = scmp.lt.s32.totalorder %s359, 31
      %s361 = scalar_select %p360, %s359, 31
      %s362 = smul.addr %s361, 8
      %s363 = scalar_lea.vmem %s8, %s362
      %s364 = smul.u32 16, %s21
      %p365 = scmp.lt.s32.totalorder %s21, 1
      %s366 = scalar_select %p365, %s21, 1
      %s367 = smul.addr %s366, 8
      %s368 = scalar_lea.vmem %s9, %s367
      %v370 = vld [vmem:[%s351] sm:$0xff]
      %v371 = vld [vmem:[%s351 + $0x8] sm:$0xff]
      %v372 = vld [vmem:[%s351 + $0x10] sm:$0xff]
      %v373 = vld [vmem:[%s351 + $0x18] sm:$0xff]
      %v374 = vld [vmem:[%s351 + $0x20] sm:$0xff]
      %v375 = vld [vmem:[%s351 + $0x28] sm:$0xff]
      %v376 = vld [vmem:[%s351 + $0x30] sm:$0xff]
      %v377 = vld [vmem:[%s351 + $0x38] sm:$0xff]
      %v378 = vld [vmem:[%s351 + $0x40] sm:$0xff]
      %v379 = vld [vmem:[%s351 + $0x48] sm:$0xff]
      %v380 = vld [vmem:[%s351 + $0x50] sm:$0xff]
      %v381 = vld [vmem:[%s351 + $0x58] sm:$0xff]
      %v382 = vld [vmem:[%s351 + $0x60] sm:$0xff]
      %v383 = vld [vmem:[%s351 + $0x68] sm:$0xff]
      %v384 = vld [vmem:[%s351 + $0x70] sm:$0xff]
      %v385 = vld [vmem:[%s351 + $0x78] sm:$0xff]
      %v386 = vld [vmem:[%s2] sm:$0x1]
      %v388 = vlaneseq
      %v389 = vshrl.u32 %v388, 7
      %v390 = vsub.s32 0, %v389
      %v391 = vrot.slane %v386, %v390
      %v393 = vmul.f32 %v370, %v391
      %v394 = vmul.f32 %v371, %v391
      %v395 = vmul.f32 %v372, %v391
      %v396 = vmul.f32 %v373, %v391
      %v397 = vmul.f32 %v374, %v391
      %v398 = vmul.f32 %v375, %v391
      %v399 = vmul.f32 %v376, %v391
      %v400 = vmul.f32 %v377, %v391
      %v401 = vmul.f32 %v378, %v391
      %v402 = vmul.f32 %v379, %v391
      %v403 = vmul.f32 %v380, %v391
      %v404 = vmul.f32 %v381, %v391
      %v405 = vmul.f32 %v382, %v391
      %v406 = vmul.f32 %v383, %v391
      %v407 = vmul.f32 %v384, %v391
      %v408 = vmul.f32 %v385, %v391
      %v409 = vld [vmem:[%s3] sm:$0x1]
      %v411 = vlaneseq
      %v412 = vshrl.u32 %v411, 7
      %v413 = vsub.s32 0, %v412
      %v414 = vrot.slane %v409, %v413
      %v416 = vadd.f32 %v393, %v414
      %v417 = vadd.f32 %v394, %v414
      %v418 = vadd.f32 %v395, %v414
      %v419 = vadd.f32 %v396, %v414
      %v420 = vadd.f32 %v397, %v414
      %v421 = vadd.f32 %v398, %v414
      %v422 = vadd.f32 %v399, %v414
      %v423 = vadd.f32 %v400, %v414
      %v424 = vadd.f32 %v401, %v414
      %v425 = vadd.f32 %v402, %v414
      %v426 = vadd.f32 %v403, %v414
      %v427 = vadd.f32 %v404, %v414
      %v428 = vadd.f32 %v405, %v414
      %v429 = vadd.f32 %v406, %v414
      %v430 = vadd.f32 %v407, %v414
      %v431 = vadd.f32 %v408, %v414
      %v432 = vld [vmem:[%s357] sm:$0xff]
      %v433 = vld [vmem:[%s357 + $0x8] sm:$0xff]
      %v434 = vld [vmem:[%s357 + $0x10] sm:$0xff]
      %v435 = vld [vmem:[%s357 + $0x18] sm:$0xff]
      %v436 = vld [vmem:[%s357 + $0x20] sm:$0xff]
      %v437 = vld [vmem:[%s357 + $0x28] sm:$0xff]
      %v438 = vld [vmem:[%s357 + $0x30] sm:$0xff]
      %v439 = vld [vmem:[%s357 + $0x38] sm:$0xff]
      %v440 = vld [vmem:[%s357 + $0x40] sm:$0xff]
      %v441 = vld [vmem:[%s357 + $0x48] sm:$0xff]
      %v442 = vld [vmem:[%s357 + $0x50] sm:$0xff]
      %v443 = vld [vmem:[%s357 + $0x58] sm:$0xff]
      %v444 = vld [vmem:[%s357 + $0x60] sm:$0xff]
      %v445 = vld [vmem:[%s357 + $0x68] sm:$0xff]
      %v446 = vld [vmem:[%s357 + $0x70] sm:$0xff]
      %v447 = vld [vmem:[%s357 + $0x78] sm:$0xff]
      %v448 = vld [vmem:[%s4] sm:$0x1]
      %v450 = vlaneseq
      %v451 = vshrl.u32 %v450, 7
      %v452 = vsub.s32 0, %v451
      %v453 = vrot.slane %v448, %v452
      %v455 = vmul.f32 %v432, %v453
      %v456 = vmul.f32 %v433, %v453
      %v457 = vmul.f32 %v434, %v453
      %v458 = vmul.f32 %v435, %v453
      %v459 = vmul.f32 %v436, %v453
      %v460 = vmul.f32 %v437, %v453
      %v461 = vmul.f32 %v438, %v453
      %v462 = vmul.f32 %v439, %v453
      %v463 = vmul.f32 %v440, %v453
      %v464 = vmul.f32 %v441, %v453
      %v465 = vmul.f32 %v442, %v453
      %v466 = vmul.f32 %v443, %v453
      %v467 = vmul.f32 %v444, %v453
      %v468 = vmul.f32 %v445, %v453
      %v469 = vmul.f32 %v446, %v453
      %v470 = vmul.f32 %v447, %v453
      %v471 = vld [vmem:[%s5] sm:$0x1]
      %v473 = vlaneseq
      %v474 = vshrl.u32 %v473, 7
      %v475 = vsub.s32 0, %v474
      %v476 = vrot.slane %v471, %v475
      %v478 = vadd.f32 %v455, %v476
      %v479 = vadd.f32 %v456, %v476
      %v480 = vadd.f32 %v457, %v476
      %v481 = vadd.f32 %v458, %v476
      %v482 = vadd.f32 %v459, %v476
      %v483 = vadd.f32 %v460, %v476
      %v484 = vadd.f32 %v461, %v476
      %v485 = vadd.f32 %v462, %v476
      %v486 = vadd.f32 %v463, %v476
      %v487 = vadd.f32 %v464, %v476
      %v488 = vadd.f32 %v465, %v476
      %v489 = vadd.f32 %v466, %v476
      %v490 = vadd.f32 %v467, %v476
      %v491 = vadd.f32 %v468, %v476
      %v492 = vadd.f32 %v469, %v476
      %v493 = vadd.f32 %v470, %v476
      %v494 = vadd.f32 %v478, %v416
      %v495 = vadd.f32 %v479, %v417
      %v496 = vadd.f32 %v480, %v418
      %v497 = vadd.f32 %v481, %v419
      %v498 = vadd.f32 %v482, %v420
      %v499 = vadd.f32 %v483, %v421
      %v500 = vadd.f32 %v484, %v422
      %v501 = vadd.f32 %v485, %v423
      %v502 = vadd.f32 %v486, %v424
      %v503 = vadd.f32 %v487, %v425
      %v504 = vadd.f32 %v488, %v426
      %v505 = vadd.f32 %v489, %v427
      %v506 = vadd.f32 %v490, %v428
      %v507 = vadd.f32 %v491, %v429
      %v508 = vadd.f32 %v492, %v430
      %v509 = vadd.f32 %v493, %v431
      %v510 = vpack.c.bf16 %v495, %v494
      %v511 = vpack.c.bf16 %v497, %v496
      %v512 = vpack.c.bf16 %v499, %v498
      %v513 = vpack.c.bf16 %v501, %v500
      %v514 = vpack.c.bf16 %v503, %v502
      %v515 = vpack.c.bf16 %v505, %v504
      %v516 = vpack.c.bf16 %v507, %v506
      %v517 = vpack.c.bf16 %v509, %v508
      %v518 = vld [vmem:[%s6] sm:$0xf]
      %v519 = vld [vmem:[%s6 + $0x4] sm:$0xf]
      %v520 = vld [vmem:[%s6 + $0x8] sm:$0xf]
      %v521 = vld [vmem:[%s6 + $0xc] sm:$0xf]
      %v522 = vld [vmem:[%s6 + $0x10] sm:$0xf]
      %v523 = vld [vmem:[%s6 + $0x14] sm:$0xf]
      %v524 = vld [vmem:[%s6 + $0x18] sm:$0xf]
      %v525 = vld [vmem:[%s6 + $0x1c] sm:$0xf]
      %v526 = vld [vmem:[%s6 + $0x20] sm:$0xf]
      %v527 = vld [vmem:[%s6 + $0x24] sm:$0xf]
      %v528 = vld [vmem:[%s6 + $0x28] sm:$0xf]
      %v529 = vld [vmem:[%s6 + $0x2c] sm:$0xf]
      %v530 = vld [vmem:[%s6 + $0x30] sm:$0xf]
      %v531 = vld [vmem:[%s6 + $0x34] sm:$0xf]
      %v532 = vld [vmem:[%s6 + $0x38] sm:$0xf]
      %v533 = vld [vmem:[%s6 + $0x3c] sm:$0xf]
      %v534 = vld [vmem:[%s7] sm:$0x1]
      %v536 = vlaneseq
      %v537 = vshrl.u32 %v536, 7
      %v538 = vsub.s32 0, %v537
      %v539 = vrot.slane %v534, %v538
      %v557 = vunpack.c.l.b16 %v518
      %v558 = vunpack.c.l.b16 %v519
      %v559 = vunpack.c.l.b16 %v520
      %v560 = vunpack.c.l.b16 %v521
      %v561 = vunpack.c.l.b16 %v522
      %v562 = vunpack.c.l.b16 %v523
      %v563 = vunpack.c.l.b16 %v524
      %v564 = vunpack.c.l.b16 %v525
      %v565 = vunpack.c.l.b16 %v526
      %v566 = vunpack.c.l.b16 %v527
      %v567 = vunpack.c.l.b16 %v528
      %v568 = vunpack.c.l.b16 %v529
      %v569 = vunpack.c.l.b16 %v530
      %v570 = vunpack.c.l.b16 %v531
      %v571 = vunpack.c.l.b16 %v532
      %v572 = vunpack.c.l.b16 %v533
      %v573 = vpack.c.b16 %v558, %v557
      %v574 = vpack.c.b16 %v560, %v559
      %v575 = vpack.c.b16 %v562, %v561
      %v576 = vpack.c.b16 %v564, %v563
      %v577 = vpack.c.b16 %v566, %v565
      %v578 = vpack.c.b16 %v568, %v567
      %v579 = vpack.c.b16 %v570, %v569
      %v580 = vpack.c.b16 %v572, %v571
      %589 = vmatprep.subr.bf16.mxu0 0
      %590 = vmatpush1.bf16.msra.mxu0 %v573
      %591 = vmatprep.subr.bf16.mxu0 0
      %592 = vmatpush1.bf16.msra.mxu0 %v574
      %593 = vmatprep.subr.bf16.mxu0 0
      %594 = vmatpush1.bf16.msra.mxu0 %v575
      %595 = vmatprep.subr.bf16.mxu0 0
      %596 = vmatpush1.bf16.msra.mxu0 %v576
      %597 = vmatprep.subr.bf16.mxu0 0
      %598 = vmatpush1.bf16.msra.mxu0 %v577
      %599 = vmatprep.subr.bf16.mxu0 0
      %600 = vmatpush1.bf16.msra.mxu0 %v578
      %601 = vmatprep.subr.bf16.mxu0 0
      %602 = vmatpush1.bf16.msra.mxu0 %v579
      %603 = vmatprep.subr.bf16.mxu0 0
      %604 = vmatpush1.bf16.msra.mxu0 %v580
      %605 = vmatprep.subr.bf16.mxu0 0
      %606 = vmatpush1.bf16.msra.mxu0 0
      %607 = vmatprep.subr.bf16.mxu0 0
      %608 = vmatpush1.bf16.msra.mxu0 0
      %609 = vmatprep.subr.bf16.mxu0 0
      %610 = vmatpush1.bf16.msra.mxu0 0
      %611 = vmatprep.subr.bf16.mxu0 0
      %612 = vmatpush1.bf16.msra.mxu0 0
      %613 = vmatprep.subr.bf16.mxu0 0
      %614 = vmatpush1.bf16.msra.mxu0 0
      %615 = vmatprep.subr.bf16.mxu0 0
      %616 = vmatpush1.bf16.msra.mxu0 0
      %617 = vmatprep.subr.bf16.mxu0 0
      %618 = vmatpush1.bf16.msra.mxu0 0
      %619 = vmatprep.subr.bf16.mxu0 0
      %620 = vmatpush1.bf16.msra.mxu0 0
      %621 = vmatprep.mubr.bf16.mxu0 0
      %622 = vmatmul.mubr.bf16.gmra.mrb[0].mxu0 %v510
      %v623 = vpop.f32.mrb[0].mxu0
      %v624 = vadd.f32 %v539, %v623
      %v625 = vpop.f32.mrb[0].mxu0
      %v626 = vpop.f32.mrb[0].mxu0
      %v627 = vadd.f32 %v539, %v626
      %v628 = vpop.f32.mrb[0].mxu0
      %629 = vmatprep.mubr.bf16.mxu0 0
      %630 = vmatmul.mubr.bf16.gmra.mrb[0].mxu0 %v511
      %v631 = vpop.f32.mrb[0].mxu0
      %v632 = vadd.f32 %v539, %v631
      %v633 = vpop.f32.mrb[0].mxu0
      %v634 = vpop.f32.mrb[0].mxu0
      %v635 = vadd.f32 %v539, %v634
      %v636 = vpop.f32.mrb[0].mxu0
      %637 = vmatprep.mubr.bf16.mxu0 0
      %638 = vmatmul.mubr.bf16.gmra.mrb[0].mxu0 %v512
      %v639 = vpop.f32.mrb[0].mxu0
      %v640 = vadd.f32 %v539, %v639
      %v641 = vpop.f32.mrb[0].mxu0
      %v642 = vpop.f32.mrb[0].mxu0
      %v643 = vadd.f32 %v539, %v642
      %v644 = vpop.f32.mrb[0].mxu0
      %645 = vmatprep.mubr.bf16.mxu0 0
      %646 = vmatmul.mubr.bf16.gmra.mrb[0].mxu0 %v513
      %v647 = vpop.f32.mrb[0].mxu0
      %v648 = vadd.f32 %v539, %v647
      %v649 = vpop.f32.mrb[0].mxu0
      %v650 = vpop.f32.mrb[0].mxu0
      %v651 = vadd.f32 %v539, %v650
      %v652 = vpop.f32.mrb[0].mxu0
      %653 = vmatprep.mubr.bf16.mxu0 0
      %654 = vmatmul.mubr.bf16.gmra.mrb[0].mxu0 %v514
      %v655 = vpop.f32.mrb[0].mxu0
      %v656 = vadd.f32 %v539, %v655
      %v657 = vpop.f32.mrb[0].mxu0
      %v658 = vpop.f32.mrb[0].mxu0
      %v659 = vadd.f32 %v539, %v658
      %v660 = vpop.f32.mrb[0].mxu0
      %661 = vmatprep.mubr.bf16.mxu0 0
      %662 = vmatmul.mubr.bf16.gmra.mrb[0].mxu0 %v515
      %v663 = vpop.f32.mrb[0].mxu0
      %v664 = vadd.f32 %v539, %v663
      %v665 = vpop.f32.mrb[0].mxu0
      %v666 = vpop.f32.mrb[0].mxu0
      %v667 = vadd.f32 %v539, %v666
      %v668 = vpop.f32.mrb[0].mxu0
      %669 = vmatprep.mubr.bf16.mxu0 0
      %670 = vmatmul.mubr.bf16.gmra.mrb[0].mxu0 %v516
      %v671 = vpop.f32.mrb[0].mxu0
      %v672 = vadd.f32 %v539, %v671
      %v673 = vpop.f32.mrb[0].mxu0
      %v674 = vpop.f32.mrb[0].mxu0
      %v675 = vadd.f32 %v539, %v674
      %v676 = vpop.f32.mrb[0].mxu0
      %677 = vmatprep.mubr.bf16.mxu0 0
      %678 = vmatmul.mubr.bf16.gmra.mrb[0].mxu0 %v517
      %v679 = vpop.f32.mrb[0].mxu0
      %v680 = vadd.f32 %v539, %v679
      %v681 = vpop.f32.mrb[0].mxu0
      %v682 = vpop.f32.mrb[0].mxu0
      %v683 = vadd.f32 %v539, %v682
      %v684 = vpop.f32.mrb[0].mxu0
      %685 = vdwg.mxu0
      %v686 = vand.u32 2147483647, %v624
      %v687 = vand.u32 2147483647, %v627
      %v688 = vand.u32 2147483647, %v632
      %v689 = vand.u32 2147483647, %v635
      %v690 = vand.u32 2147483647, %v640
      %v691 = vand.u32 2147483647, %v643
      %v692 = vand.u32 2147483647, %v648
      %v693 = vand.u32 2147483647, %v651
      %v694 = vand.u32 2147483647, %v656
      %v695 = vand.u32 2147483647, %v659
      %v696 = vand.u32 2147483647, %v664
      %v697 = vand.u32 2147483647, %v667
      %v698 = vand.u32 2147483647, %v672
      %v699 = vand.u32 2147483647, %v675
      %v700 = vand.u32 2147483647, %v680
      %v701 = vand.u32 2147483647, %v683
      %v702 = vsub.f32 0.0, %v686
      %v703 = vsub.f32 0.0, %v687
      %v704 = vsub.f32 0.0, %v688
      %v705 = vsub.f32 0.0, %v689
      %v706 = vsub.f32 0.0, %v690
      %v707 = vsub.f32 0.0, %v691
      %v708 = vsub.f32 0.0, %v692
      %v709 = vsub.f32 0.0, %v693
      %v710 = vsub.f32 0.0, %v694
      %v711 = vsub.f32 0.0, %v695
      %v712 = vsub.f32 0.0, %v696
      %v713 = vsub.f32 0.0, %v697
      %v714 = vsub.f32 0.0, %v698
      %v715 = vsub.f32 0.0, %v699
      %v716 = vsub.f32 0.0, %v700
      %v717 = vsub.f32 0.0, %v701
      %v718 = vmul.f32 %v702, 1.442695
      %v719 = vpow.pop %v718
      %v720 = vmul.f32 %v703, 1.442695
      %v721 = vpow.pop %v720
      %v722 = vmul.f32 %v704, 1.442695
      %v723 = vpow.pop %v722
      %v724 = vmul.f32 %v705, 1.442695
      %v725 = vpow.pop %v724
      %v726 = vmul.f32 %v706, 1.442695
      %v727 = vpow.pop %v726
      %v728 = vmul.f32 %v707, 1.442695
      %v729 = vpow.pop %v728
      %v730 = vmul.f32 %v708, 1.442695
      %v731 = vpow.pop %v730
      %v732 = vmul.f32 %v709, 1.442695
      %v733 = vpow.pop %v732
      %v734 = vmul.f32 %v710, 1.442695
      %v735 = vpow.pop %v734
      %v736 = vmul.f32 %v711, 1.442695
      %v737 = vpow.pop %v736
      %v738 = vmul.f32 %v712, 1.442695
      %v739 = vpow.pop %v738
      %v740 = vmul.f32 %v713, 1.442695
      %v741 = vpow.pop %v740
      %v742 = vmul.f32 %v714, 1.442695
      %v743 = vpow.pop %v742
      %v744 = vmul.f32 %v715, 1.442695
      %v745 = vpow.pop %v744
      %v746 = vmul.f32 %v716, 1.442695
      %v747 = vpow.pop %v746
      %v748 = vmul.f32 %v717, 1.442695
      %v749 = vpow.pop %v748
      %v750 = vadd.f32 %v719, 1.0
      %v751 = vadd.f32 %v721, 1.0
      %v752 = vadd.f32 %v723, 1.0
      %v753 = vadd.f32 %v725, 1.0
      %v754 = vadd.f32 %v727, 1.0
      %v755 = vadd.f32 %v729, 1.0
      %v756 = vadd.f32 %v731, 1.0
      %v757 = vadd.f32 %v733, 1.0
      %v758 = vadd.f32 %v735, 1.0
      %v759 = vadd.f32 %v737, 1.0
      %v760 = vadd.f32 %v739, 1.0
      %v761 = vadd.f32 %v741, 1.0
      %v762 = vadd.f32 %v743, 1.0
      %v763 = vadd.f32 %v745, 1.0
      %v764 = vadd.f32 %v747, 1.0
      %v765 = vadd.f32 %v749, 1.0
      %v766 = vrcp.pop %v750
      %v767 = vmul.f32 1.0, %v766
      %v768 = vrcp.pop %v751
      %v769 = vmul.f32 1.0, %v768
      %v770 = vrcp.pop %v752
      %v771 = vmul.f32 1.0, %v770
      %v772 = vrcp.pop %v753
      %v773 = vmul.f32 1.0, %v772
      %v774 = vrcp.pop %v754
      %v775 = vmul.f32 1.0, %v774
      %v776 = vrcp.pop %v755
      %v777 = vmul.f32 1.0, %v776
      %v778 = vrcp.pop %v756
      %v779 = vmul.f32 1.0, %v778
      %v780 = vrcp.pop %v757
      %v781 = vmul.f32 1.0, %v780
      %v782 = vrcp.pop %v758
      %v783 = vmul.f32 1.0, %v782
      %v784 = vrcp.pop %v759
      %v785 = vmul.f32 1.0, %v784
      %v786 = vrcp.pop %v760
      %v787 = vmul.f32 1.0, %v786
      %v788 = vrcp.pop %v761
      %v789 = vmul.f32 1.0, %v788
      %v790 = vrcp.pop %v762
      %v791 = vmul.f32 1.0, %v790
      %v792 = vrcp.pop %v763
      %v793 = vmul.f32 1.0, %v792
      %v794 = vrcp.pop %v764
      %v795 = vmul.f32 1.0, %v794
      %v796 = vrcp.pop %v765
      %v797 = vmul.f32 1.0, %v796
      %vm798 = vcmp.ge.f32.partialorder %v624, 0.0
      %vm799 = vcmp.ge.f32.partialorder %v627, 0.0
      %vm800 = vcmp.ge.f32.partialorder %v632, 0.0
      %vm801 = vcmp.ge.f32.partialorder %v635, 0.0
      %vm802 = vcmp.ge.f32.partialorder %v640, 0.0
      %vm803 = vcmp.ge.f32.partialorder %v643, 0.0
      %vm804 = vcmp.ge.f32.partialorder %v648, 0.0
      %vm805 = vcmp.ge.f32.partialorder %v651, 0.0
      %vm806 = vcmp.ge.f32.partialorder %v656, 0.0
      %vm807 = vcmp.ge.f32.partialorder %v659, 0.0
      %vm808 = vcmp.ge.f32.partialorder %v664, 0.0
      %vm809 = vcmp.ge.f32.partialorder %v667, 0.0
      %vm810 = vcmp.ge.f32.partialorder %v672, 0.0
      %vm811 = vcmp.ge.f32.partialorder %v675, 0.0
      %vm812 = vcmp.ge.f32.partialorder %v680, 0.0
      %vm813 = vcmp.ge.f32.partialorder %v683, 0.0
      %v814 = vmul.f32 %v719, %v767
      %v815 = vmul.f32 %v721, %v769
      %v816 = vmul.f32 %v723, %v771
      %v817 = vmul.f32 %v725, %v773
      %v818 = vmul.f32 %v727, %v775
      %v819 = vmul.f32 %v729, %v777
      %v820 = vmul.f32 %v731, %v779
      %v821 = vmul.f32 %v733, %v781
      %v822 = vmul.f32 %v735, %v783
      %v823 = vmul.f32 %v737, %v785
      %v824 = vmul.f32 %v739, %v787
      %v825 = vmul.f32 %v741, %v789
      %v826 = vmul.f32 %v743, %v791
      %v827 = vmul.f32 %v745, %v793
      %v828 = vmul.f32 %v747, %v795
      %v829 = vmul.f32 %v749, %v797
      %v830 = vsel %vm798, %v767, %v814
      %v831 = vsel %vm799, %v769, %v815
      %v832 = vsel %vm800, %v771, %v816
      %v833 = vsel %vm801, %v773, %v817
      %v834 = vsel %vm802, %v775, %v818
      %v835 = vsel %vm803, %v777, %v819
      %v836 = vsel %vm804, %v779, %v820
      %v837 = vsel %vm805, %v781, %v821
      %v838 = vsel %vm806, %v783, %v822
      %v839 = vsel %vm807, %v785, %v823
      %v840 = vsel %vm808, %v787, %v824
      %v841 = vsel %vm809, %v789, %v825
      %v842 = vsel %vm810, %v791, %v826
      %v843 = vsel %vm811, %v793, %v827
      %v844 = vsel %vm812, %v795, %v828
      %v845 = vsel %vm813, %v797, %v829
      %v846 = vmul.f32 %v624, %v830
      %v847 = vmul.f32 %v627, %v831
      %v848 = vmul.f32 %v632, %v832
      %v849 = vmul.f32 %v635, %v833
      %v850 = vmul.f32 %v640, %v834
      %v851 = vmul.f32 %v643, %v835
      %v852 = vmul.f32 %v648, %v836
      %v853 = vmul.f32 %v651, %v837
      %v854 = vmul.f32 %v656, %v838
      %v855 = vmul.f32 %v659, %v839
      %v856 = vmul.f32 %v664, %v840
      %v857 = vmul.f32 %v667, %v841
      %v858 = vmul.f32 %v672, %v842
      %v859 = vmul.f32 %v675, %v843
      %v860 = vmul.f32 %v680, %v844
      %v861 = vmul.f32 %v683, %v845
      %862 = vst [vmem:[%s363] sm:$0xff] %v846
      %863 = vst [vmem:[%s363 + $0x8] sm:$0xff] %v847
      %864 = vst [vmem:[%s363 + $0x10] sm:$0xff] %v848
      %865 = vst [vmem:[%s363 + $0x18] sm:$0xff] %v849
      %866 = vst [vmem:[%s363 + $0x20] sm:$0xff] %v850
      %867 = vst [vmem:[%s363 + $0x28] sm:$0xff] %v851
      %868 = vst [vmem:[%s363 + $0x30] sm:$0xff] %v852
      %869 = vst [vmem:[%s363 + $0x38] sm:$0xff] %v853
      %870 = vst [vmem:[%s363 + $0x40] sm:$0xff] %v854
      %871 = vst [vmem:[%s363 + $0x48] sm:$0xff] %v855
      %872 = vst [vmem:[%s363 + $0x50] sm:$0xff] %v856
      %873 = vst [vmem:[%s363 + $0x58] sm:$0xff] %v857
      %874 = vst [vmem:[%s363 + $0x60] sm:$0xff] %v858
      %875 = vst [vmem:[%s363 + $0x68] sm:$0xff] %v859
      %876 = vst [vmem:[%s363 + $0x70] sm:$0xff] %v860
      %877 = vst [vmem:[%s363 + $0x78] sm:$0xff] %v861
      %v878 = vadd.f32 %v846, %v847
      %v879 = vadd.f32 %v878, %v848
      %v880 = vadd.f32 %v879, %v849
      %v881 = vadd.f32 %v880, %v850
      %v882 = vadd.f32 %v881, %v851
      %v883 = vadd.f32 %v882, %v852
      %v884 = vadd.f32 %v883, %v853
      %v885 = vadd.f32 %v884, %v854
      %v886 = vadd.f32 %v885, %v855
      %v887 = vadd.f32 %v886, %v856
      %v888 = vadd.f32 %v887, %v857
      %v889 = vadd.f32 %v888, %v858
      %v890 = vadd.f32 %v889, %v859
      %v891 = vadd.f32 %v890, %v860
      %v892 = vadd.f32 %v891, %v861
      %v893 = vrot.slane %v892, 4
      %v894 = vadd.f32 %v892, %v893
      %v895 = vrot.slane %v894, 2
      %v896 = vadd.f32 %v894, %v895
      %v897 = vrot.slane %v896, 1
      %v898 = vadd.f32 %v896, %v897
      %v899 = vmul.f32 %v846, %v846
      %v900 = vmul.f32 %v847, %v847
      %v901 = vmul.f32 %v848, %v848
      %v902 = vmul.f32 %v849, %v849
      %v903 = vmul.f32 %v850, %v850
      %v904 = vmul.f32 %v851, %v851
      %v905 = vmul.f32 %v852, %v852
      %v906 = vmul.f32 %v853, %v853
      %v907 = vmul.f32 %v854, %v854
      %v908 = vmul.f32 %v855, %v855
      %v909 = vmul.f32 %v856, %v856
      %v910 = vmul.f32 %v857, %v857
      %v911 = vmul.f32 %v858, %v858
      %v912 = vmul.f32 %v859, %v859
      %v913 = vmul.f32 %v860, %v860
      %v914 = vmul.f32 %v861, %v861
      %v915 = vadd.f32 %v899, %v900
      %v916 = vadd.f32 %v915, %v901
      %v917 = vadd.f32 %v916, %v902
      %v918 = vadd.f32 %v917, %v903
      %v919 = vadd.f32 %v918, %v904
      %v920 = vadd.f32 %v919, %v905
      %v921 = vadd.f32 %v920, %v906
      %v922 = vadd.f32 %v921, %v907
      %v923 = vadd.f32 %v922, %v908
      %v924 = vadd.f32 %v923, %v909
      %v925 = vadd.f32 %v924, %v910
      %v926 = vadd.f32 %v925, %v911
      %v927 = vadd.f32 %v926, %v912
      %v928 = vadd.f32 %v927, %v913
      %v929 = vadd.f32 %v928, %v914
      %v930 = vrot.slane %v929, 4
      %v931 = vadd.f32 %v929, %v930
      %v932 = vrot.slane %v931, 2
      %v933 = vadd.f32 %v931, %v932
      %v934 = vrot.slane %v933, 1
      %v935 = vadd.f32 %v933, %v934
      %vm936 = vcmask 1040384
      %v937 = vsel %vm936, %v898, %v935
      %vm938 = vcmask 1041408
      %v939 = vsel %vm938, %v937, 0.0
      %vm940 = vcmask 1042432
      %v941 = vsel %vm940, %v939, 0.0
      %vm942 = vcmask 1043456
      %v943 = vsel %vm942, %v941, 0.0
      %vm944 = vcmask 1044480
      %v945 = vsel %vm944, %v943, 0.0
      %vm946 = vcmask 1045504
      %v947 = vsel %vm946, %v945, 0.0
      %vm948 = vcmask 1046528
      %v949 = vsel %vm948, %v947, 0.0
      %950 = vst [vmem:[%s368] sm:$0xff] %v949
      %s951 = smul.u32 16, %s21
      %p952 = scmp.lt.s32.totalorder %s951, 31
      %s953 = scalar_select %p952, %s951, 31
      %s954 = smul.addr %s953, 8
      %s955 = scalar_lea.vmem %s8, %s954
      %p956 = scmp.lt.s32.totalorder %s21, 1
      %s957 = scalar_select %p956, %s21, 1
      %s958 = smul.addr %s957, 8
      %s959 = scalar_lea.vmem %s9, %s958
      // Predicated region
      $region53: #{residual_block.4} parent=51 // pred_check
        %p960 = pneg %p217
      $region54: #{residual_block.4} parent=51 // pred_check_branch
        %962 = sbr.rel (%p960) target = $region56
      $region55: #{residual_block.4} parent=51 // pred_region
        %s963 = smul.u32 16, %s21
      $region56: #{residual_block.4} parent=51 // pred_fallthru
        _
      // Predicated region
      $region57: #{residual_block.4} parent=51 // pred_check
        %p964 = pneg %p243
      $region58: #{residual_block.4} parent=51 // pred_check_branch
        %966 = sbr.rel (%p964) target = $region60
      $region59: #{residual_block.4} parent=51 // pred_region
        _
      $region60: #{residual_block.4} parent=51 // pred_fallthru
        _
    $region52: #{residual_block.4} parent=5 // pred_fallthru
      _
    %p967 = scmp.le.s32.totalorder 2, %s16
    // Predicated region
    $region61: #{residual_block.4} parent=5 // pred_check
      %p968 = pneg %p967
    $region62: #{residual_block.4} parent=5 // pred_check_branch
      %970 = sbr.rel (%p968) target = $region64
    $region63: #{residual_block.4} parent=5 // pred_region
      %s971 = ssub.s32 %s16, 2
      // Predicated region
      $region65: #{residual_block.4} parent=63 // pred_check
        %p972 = pneg %p223
      $region66: #{residual_block.4} parent=63 // pred_check_branch
        %974 = sbr.rel (%p972) target = $region68
      $region67: #{residual_block.4} parent=63 // pred_region
        %s975 = smul.u32 16, %s22
        %p976 = scmp.lt.s32.totalorder %s975, 31
        %s977 = scalar_select %p976, %s975, 31
        %s978 = smul.addr %s977, 8
        %s979 = scalar_lea.vmem %s8, %s978
      $region68: #{residual_block.4} parent=63 // pred_fallthru
        _
      // Predicated region
      $region69: #{residual_block.4} parent=63 // pred_check
        %p980 = pneg %p249
      $region70: #{residual_block.4} parent=63 // pred_check_branch
        %982 = sbr.rel (%p980) target = $region72
      $region71: #{residual_block.4} parent=63 // pred_region
        %p983 = scmp.lt.s32.totalorder %s22, 1
        %s984 = scalar_select %p983, %s22, 1
        %s985 = smul.addr %s984, 8
        %s986 = scalar_lea.vmem %s9, %s985
      $region72: #{residual_block.4} parent=63 // pred_fallthru
        _
    $region64: #{residual_block.4} parent=5 // pred_fallthru
      _
  $region6: #{residual_block.4} parent=0 // loop_footer
    %s20 = sadd.s32 1, %s16
  $region7: #{residual_block.4} parent=0 // loop_footer_branch
    %15 = sbr.rel target = $region3
  $region8: #{residual_block.4} parent=0 // loop_exit
    _

</llo_original>
